<compile_context>
chip_gen: v6e
topology: v6e:2x2x1
jax: 0.10.0
libtpu: 0.0.40
codegen_flags: <defaults>
</compile_context>

<pallas_src>
import math

import jax
import jax.numpy as jnp
import numpy as np
from jax.experimental import pallas as pl
from jax.experimental.pallas import tpu as pltpu

CONNECTIONS = {10: [9], 9: [8, 10], 8: [7, 9], 14: [15, 8], 15: [16, 14],
               11: [12, 8], 12: [13, 11], 7: [0, 8], 0: [1, 7], 1: [2, 0],
               2: [3, 1], 4: [5, 0], 5: [6, 4], 16: [15], 13: [12], 3: [2], 6: [5]}

BN_EPS = 1e-5


# ---------------------------------------------------------------------------
# Static (compile-time) graph preprocessing -- hoisted out of the kernel.
# ---------------------------------------------------------------------------
def build_spatial_adj(num_nodes):
    a = np.zeros((num_nodes, num_nodes), dtype=np.float32)
    for i in range(num_nodes):
        for k in CONNECTIONS[i]:
            a[i, k] = 1.0
    return a


def normalize_digraph_np(adj):
    """norm_adj = D^-1/2 A D^-1/2 (numpy, computed once per adjacency)."""
    adj = np.asarray(adj, dtype=np.float32)
    deg = adj.sum(-1)
    dinv = deg ** -0.5                       # all degrees >= 1 for CONNECTIONS
    return (dinv[:, None] * adj) * dinv[None, :]


def _round_up(x, m):
    return ((x + m - 1) // m) * m


def _choose_tile(n, target):
    target = max(8, (target // 8) * 8)
    if n <= target:
        return _round_up(n, 8)
    return target


def _vmem_limit(block_bytes):
    # Everything is double-buffered by the pipeline; add 4 MiB headroom.  Clamp well
    # below the smallest physical VMEM (64 MiB on v7x; v5e/v6e have 128 MiB).
    need = 2 * int(sum(block_bytes)) + (4 << 20)
    return int(min(max(need, 16 << 20), 56 << 20))


# ---------------------------------------------------------------------------
# Kernels
# ---------------------------------------------------------------------------
def _make_proj_stats_kernel(n_rows, tile_n, co_tot, has_tail, use_bf16):
    """Pass 1: h = x @ W_eff + b_eff; store h; emit per-tile partial BN sums."""

    def kernel(x_ref, w_ref, b_ref, h_ref, psum_ref, psq_ref):
        x = x_ref[...]                                            # [TILE_N, J*Cin]
        if use_bf16:
            x = x.astype(jnp.bfloat16)
        h = jnp.dot(x, w_ref[...],
                    preferred_element_type=jnp.float32) + b_ref[...]
        h_ref[...] = h                                            # pre-BN activations
        if has_tail:
            # cdiv grid: mask rows past n_rows in the last (partial) tile so garbage-
            # padded reads never reach the statistics (use where, not *, since the
            # padding may contain NaN bit patterns).
            row = jax.lax.broadcasted_iota(jnp.int32, (tile_n, 1), 0)
            valid = (row + pl.program_id(0) * tile_n) < n_rows
            h = jnp.where(valid, h, 0.0)
        psum_ref[...] = jnp.sum(h, axis=0, keepdims=True).reshape(1, 1, co_tot)
        psq_ref[...] = jnp.sum(h * h, axis=0, keepdims=True).reshape(1, 1, co_tot)

    return kernel


def _make_bn_epilogue_kernel(residual):
    """Pass 2: out = relu(h * scale + shift [+ x]); runs in place over h."""

    if residual:
        def kernel(h_ref, x_ref, scale_ref, shift_ref, out_ref):
            y = h_ref[...] * scale_ref[...] + shift_ref[...] + x_ref[...]
            out_ref[...] = jnp.maximum(y, 0.0)
    else:
        def kernel(h_ref, scale_ref, shift_ref, out_ref):
            y = h_ref[...] * scale_ref[...] + shift_ref[...]
            out_ref[...] = jnp.maximum(y, 0.0)

    return kernel


# ---------------------------------------------------------------------------
# Wrapper
# ---------------------------------------------------------------------------
def gcn_forward(x, adj, uw, ub, vw, vb, gamma, beta, *, tile_n=None,
                target_tile=512, use_bf16=False):
    """GCN spatial forward (training-mode BatchNorm batch statistics).

    x: [B, T, J, C_in]; adj: numpy [J, J] (module buffer, compile-time constant);
    uw/vw: [C_in, C_out] (pre-transposed nn.Linear weights); ub/vb: [1, C_out];
    gamma/beta: [J] BatchNorm1d affine parameters.
    Returns (out [B, T, J, C_out], shortx == x).
    """
    b, t, j, c_in = x.shape
    c_out = uw.shape[1]
    n = b * t
    ci_tot = j * c_in
    co_tot = j * c_out
    residual = (c_in == c_out)           # PyTorch adds the shortcut only in this case

    if tile_n is None:
        tile_n = _choose_tile(n, target_tile)
    tile_n = int(tile_n)
    assert tile_n % 8 == 0, "tile_n must be a multiple of 8"
    num_tiles = -(-n // tile_n)          # cdiv grid; tail handled via masking
    has_tail = num_tiles * tile_n != n

    # Fused projection + aggregation weight (~J^2*Cin*Cout*4 bytes, ~1.2 MiB for
    # J=17, C=32 -- built once in XLA, stays resident in VMEM across all grid steps).
    norm_adj = normalize_digraph_np(adj)                           # numpy [J, J]
    uw = uw.astype(jnp.float32)
    vw = vw.astype(jnp.float32)
    w_eff = (jnp.kron(jnp.eye(j, dtype=jnp.float32), uw)
             + jnp.kron(jnp.asarray(norm_adj.T), vw))              # [J*Cin, J*Cout]
    b_eff = (jnp.broadcast_to(ub.reshape(1, c_out).astype(jnp.float32), (j, c_out))
             + jnp.asarray(norm_adj.sum(-1), dtype=jnp.float32)[:, None]
             * vb.reshape(1, c_out).astype(jnp.float32)).reshape(1, co_tot)
    if use_bf16:
        # Optional MXU speedup on v6e/v7x; check the accuracy budget before enabling.
        w_eff = w_eff.astype(jnp.bfloat16)

    # Natural layout: [B,T,J,C] -> [N, J*C] is a free reshape (no HBM transpose).
    x2 = x.reshape(n, ci_tot).astype(jnp.float32)

    x_spec = pl.BlockSpec((tile_n, ci_tot), lambda i: (i, 0))
    w_spec = pl.BlockSpec((ci_tot, co_tot), lambda i: (0, 0))
    vec_spec = pl.BlockSpec((1, co_tot), lambda i: (0, 0))         # bias / scale / shift
    h_spec = pl.BlockSpec((tile_n, co_tot), lambda i: (i, 0))
    stat_spec = pl.BlockSpec((1, 1, co_tot), lambda i: (i, 0, 0))  # per-tile partials

    # ---- Pass 1: fused projection + aggregation, store h, per-tile BN partial sums.
    flops1 = 2 * n * ci_tot * co_tot + 3 * n * co_tot
    bytes1 = 4 * (n * ci_tot + ci_tot * co_tot + co_tot
                  + n * co_tot + 2 * num_tiles * co_tot)
    blocks1 = [tile_n * ci_tot * 4, ci_tot * co_tot * (2 if use_bf16 else 4),
               co_tot * 4, tile_n * co_tot * 4, 2 * co_tot * 4]
    h, psum, psq = pl.pallas_call(
        _make_proj_stats_kernel(n, tile_n, co_tot, has_tail, use_bf16),
        out_shape=(jax.ShapeDtypeStruct((n, co_tot), jnp.float32),
                   jax.ShapeDtypeStruct((num_tiles, 1, co_tot), jnp.float32),
                   jax.ShapeDtypeStruct((num_tiles, 1, co_tot), jnp.float32)),
        grid=(num_tiles,),
        in_specs=[x_spec, w_spec, vec_spec],
        out_specs=(h_spec, stat_spec, stat_spec),
        compiler_params=pltpu.CompilerParams(
            dimension_semantics=("parallel",),      # no carried state -> megacore-safe
            vmem_limit_bytes=_vmem_limit(blocks1)),
        cost_estimate=pl.CostEstimate(flops=flops1, transcendentals=0,
                                      bytes_accessed=bytes1),
    )(x2, w_eff, b_eff)

    # ---- Fold BatchNorm1d(num_nodes) batch stats (over N and C_out, per joint) into
    # one scale/shift.  NOTE: single-pass E[h^2]-E[h]^2 can lose precision when
    # |mean| >> std; the max(., 0) guard keeps it finite.
    count = n * c_out
    ssum = jnp.sum(psum, axis=(0, 1)).reshape(j, c_out)
    ssq = jnp.sum(psq, axis=(0, 1)).reshape(j, c_out)
    mean = jnp.sum(ssum, axis=1) / count
    ex2 = jnp.sum(ssq, axis=1) / count
    var = jnp.maximum(ex2 - mean * mean, 0.0)
    inv_std = jax.lax.rsqrt(var + BN_EPS)
    g = gamma.reshape(j).astype(jnp.float32)
    be = beta.reshape(j).astype(jnp.float32)
    scale_j = g * inv_std
    shift_j = be - mean * scale_j
    # Lane-dense (1, J*C_out) vectors -> one broadcast multiply/add per tile in pass 2.
    scale = jnp.broadcast_to(scale_j[:, None], (j, c_out)).reshape(1, co_tot)
    shift = jnp.broadcast_to(shift_j[:, None], (j, c_out)).reshape(1, co_tot)

    # ---- Pass 2: in-place folded BN scale/shift (+ residual) + ReLU over h.
    flops2 = (4 if residual else 3) * n * co_tot
    bytes2 = 4 * ((3 if residual else 2) * n * co_tot + 2 * co_tot)
    blocks2 = [tile_n * co_tot * 4] * (3 if residual else 2) + [co_tot * 4] * 2
    if residual:
        inputs = (h, x2, scale, shift)
        in_specs2 = [h_spec, x_spec, vec_spec, vec_spec]
    else:
        inputs = (h, scale, shift)
        in_specs2 = [h_spec, vec_spec, vec_spec]
    out2 = pl.pallas_call(
        _make_bn_epilogue_kernel(residual),
        out_shape=jax.ShapeDtypeStruct((n, co_tot), jnp.float32),
        grid=(num_tiles,),
        in_specs=in_specs2,
        out_specs=h_spec,
        input_output_aliases={0: 0},                 # write the result back into h
        compiler_params=pltpu.CompilerParams(
            dimension_semantics=("parallel",),
            vmem_limit_bytes=_vmem_limit(blocks2)),
        cost_estimate=pl.CostEstimate(flops=flops2, transcendentals=0,
                                      bytes_accessed=bytes2),
    )(*inputs)

    out = out2.reshape(b, t, j, c_out)               # free reshape, no transpose
    return out, x


# ---------------------------------------------------------------------------
# Pure-JAX reference (mirrors the PyTorch module's spatial path).
# ---------------------------------------------------------------------------
def reference_forward(x, adj, uw, ub, vw, vb, gamma, beta):
    b, t, j, c = x.shape
    norm_adj = jnp.asarray(normalize_digraph_np(adj))
    xf = x.reshape(b * t, j, c)
    ux = xf @ uw + ub
    vx = xf @ vw + vb
    h = jnp.einsum('jk,nkc->njc', norm_adj, vx) + ux
    mean = h.mean(axis=(0, 2), keepdims=True)
    var = ((h - mean) ** 2).mean(axis=(0, 2), keepdims=True)
    y = (h - mean) * jax.lax.rsqrt(var + BN_EPS) * gamma.reshape(1, j, 1) \
        + beta.reshape(1, j, 1)
    if uw.shape[0] == uw.shape[1]:                   # residual only if dim_in == dim_out
        y = y + xf
    out = jnp.maximum(y, 0.0)
    return out.reshape(b, t, j, -1), x


if __name__ == "__main__":
    B, T, J = 2, 64, 17
    DIM_IN = DIM_OUT = 32

    key = jax.random.PRNGKey(0)
    kx, ku, kub, kv, kvb = jax.random.split(key, 5)

    # Deterministic parameter init mirroring GCN.__init__ / _init_gcn.
    std = math.sqrt(2.0 / DIM_IN)
    uw = jax.random.normal(ku, (DIM_IN, DIM_OUT), dtype=jnp.float32) * std
    vw = jax.random.normal(kv, (DIM_IN, DIM_OUT), dtype=jnp.float32) * std
    bound = 1.0 / math.sqrt(DIM_IN)
    ub = jax.random.uniform(kub, (1, DIM_OUT), minval=-bound, maxval=bound,
                            dtype=jnp.float32)
    vb = jax.random.uniform(kvb, (1, DIM_OUT), minval=-bound, maxval=bound,
                            dtype=jnp.float32)
    gamma = jnp.ones((J,), dtype=jnp.float32)        # batch_norm.weight = 1
    beta = jnp.zeros((J,), dtype=jnp.float32)        # batch_norm.bias = 0

    adj = build_spatial_adj(J)                       # numpy, module-constant buffer
    x = jax.random.normal(kx, (B, T, J, DIM_IN), dtype=jnp.float32)

    # N = B*T = 128 rows; tile_n=32 -> 4 pipelined grid steps per pass.
    run = jax.jit(lambda xx, *p: gcn_forward(xx, adj, *p, tile_n=32))
    out, shortx = run(x, uw, ub, vw, vb, gamma, beta)
    out = jax.block_until_ready(out)
    shortx = jax.block_until_ready(shortx)

    ref_out, ref_short = reference_forward(x, adj, uw, ub, vw, vb, gamma, beta)
    np.testing.assert_allclose(np.asarray(out), np.asarray(ref_out),
                               rtol=2e-4, atol=2e-4)
    np.testing.assert_allclose(np.asarray(shortx), np.asarray(x), rtol=0, atol=0)

    # Exercise the cdiv-grid + masked-tail path: 128 rows / tile_n=48 -> 3 tiles,
    # last tile only 32 rows valid.
    run_tail = jax.jit(lambda xx, *p: gcn_forward(xx, adj, *p, tile_n=48))
    out_tail, _ = run_tail(x, uw, ub, vw, vb, gamma, beta)
    np.testing.assert_allclose(np.asarray(jax.block_until_ready(out_tail)),
                               np.asarray(ref_out), rtol=2e-4, atol=2e-4)

    print("KERNEL_OK")
</pallas_src>

<mosaic_0001>
module attributes {stable_mosaic.version = 11 : i64} {
  func.func @kernel(%arg0: i32, %arg1: memref<32x544xf32, #tpu.memory_space<vmem>>, %arg2: memref<544x544xf32, #tpu.memory_space<vmem>>, %arg3: memref<1x544xf32, #tpu.memory_space<vmem>>, %arg4: memref<32x544xf32, #tpu.memory_space<vmem>>, %arg5: memref<1x1x544xf32, #tpu.memory_space<vmem>>, %arg6: memref<1x1x544xf32, #tpu.memory_space<vmem>>) attributes {dimension_semantics = [#tpu.dimension_semantics<parallel>], iteration_bounds = array<i64: 4>, scalar_prefetch = 0 : i64, scratch_operands = 0 : i64, tpu.core_type = #tpu.core_type<tc>, window_params = [{transform_indices = @transform_0, window_bounds = array<i64: 32, 544>}, {pipeline_mode = #tpu.pipeline_mode<synchronous>, transform_indices = @transform_1, window_bounds = array<i64: 544, 544>}, {pipeline_mode = #tpu.pipeline_mode<synchronous>, transform_indices = @transform_2, window_bounds = array<i64: 1, 544>}, {transform_indices = @transform_3, window_bounds = array<i64: 32, 544>}, {transform_indices = @transform_4, window_bounds = array<i64: 1, 1, 544>}, {transform_indices = @transform_5, window_bounds = array<i64: 1, 1, 544>}]} {
    %c0 = arith.constant 0 : index
    %c0_0 = arith.constant 0 : index
    %0 = vector.load %arg1[%c0, %c0_0] : memref<32x544xf32, #tpu.memory_space<vmem>>, vector<32x544xf32>
    %c0_1 = arith.constant 0 : index
    %c0_2 = arith.constant 0 : index
    %1 = vector.load %arg2[%c0_1, %c0_2] : memref<544x544xf32, #tpu.memory_space<vmem>>, vector<544x544xf32>
    %cst = arith.constant dense<0.000000e+00> : vector<32x544xf32>
    %2 = tpu.matmul %0, %1, %cst {dimension_numbers = #tpu.dot_dimension_numbers<[1], [0], [0], [1], [0, 0, 1, 1], [], []>} : vector<32x544xf32>, vector<544x544xf32>, vector<32x544xf32> -> vector<32x544xf32>
    %c0_3 = arith.constant 0 : index
    %c0_4 = arith.constant 0 : index
    %3 = vector.load %arg3[%c0_3, %c0_4] : memref<1x544xf32, #tpu.memory_space<vmem>>, vector<1x544xf32>
    %4 = vector.broadcast %3 : vector<1x544xf32> to vector<32x544xf32>
    %5 = arith.addf %2, %4 : vector<32x544xf32>
    %c0_5 = arith.constant 0 : index
    %c0_6 = arith.constant 0 : index
    %6 = vector.load %arg4[%c0_5, %c0_6] : memref<32x544xf32, #tpu.memory_space<vmem>>, vector<32x544xf32>
    tpu.vector_store %arg4[%c0_5, %c0_6], %5 {strides = array<i32>} : memref<32x544xf32, #tpu.memory_space<vmem>>, vector<32x544xf32>,
    %cst_7 = arith.constant dense<0.000000e+00> : vector<544xf32>
    %7 = vector.multi_reduction <add>, %5, %cst_7 [0] : vector<32x544xf32> to vector<544xf32>
    %8 = vector.shape_cast %7 : vector<544xf32> to vector<1x544xf32>
    %9 = vector.shape_cast %8 : vector<1x544xf32> to vector<1x1x544xf32>
    %c0_8 = arith.constant 0 : index
    %c0_9 = arith.constant 0 : index
    %c0_10 = arith.constant 0 : index
    %10 = vector.load %arg5[%c0_8, %c0_9, %c0_10] : memref<1x1x544xf32, #tpu.memory_space<vmem>>, vector<1x1x544xf32>
    tpu.vector_store %arg5[%c0_8, %c0_9, %c0_10], %9 {strides = array<i32>} : memref<1x1x544xf32, #tpu.memory_space<vmem>>, vector<1x1x544xf32>,
    %11 = arith.mulf %5, %5 : vector<32x544xf32>
    %cst_11 = arith.constant dense<0.000000e+00> : vector<544xf32>
    %12 = vector.multi_reduction <add>, %11, %cst_11 [0] : vector<32x544xf32> to vector<544xf32>
    %13 = vector.shape_cast %12 : vector<544xf32> to vector<1x544xf32>
    %14 = vector.shape_cast %13 : vector<1x544xf32> to vector<1x1x544xf32>
    %c0_12 = arith.constant 0 : index
    %c0_13 = arith.constant 0 : index
    %c0_14 = arith.constant 0 : index
    %15 = vector.load %arg6[%c0_12, %c0_13, %c0_14] : memref<1x1x544xf32, #tpu.memory_space<vmem>>, vector<1x1x544xf32>
    tpu.vector_store %arg6[%c0_12, %c0_13, %c0_14], %14 {strides = array<i32>} : memref<1x1x544xf32, #tpu.memory_space<vmem>>, vector<1x1x544xf32>,
    return
  }
  func.func @transform_0(%arg0: i32) -> (i32, i32) {
    %c0_i32 = arith.constant 0 : i32
    %c0_i32_0 = arith.constant 0 : i32
    return %arg0, %c0_i32 : i32, i32
  }
  func.func @transform_1(%arg0: i32) -> (i32, i32) {
    %c0_i32 = arith.constant 0 : i32
    %c0_i32_0 = arith.constant 0 : i32
    %c0_i32_1 = arith.constant 0 : i32
    return %c0_i32, %c0_i32_0 : i32, i32
  }
  func.func @transform_2(%arg0: i32) -> (i32, i32) {
    %c0_i32 = arith.constant 0 : i32
    %c0_i32_0 = arith.constant 0 : i32
    %c0_i32_1 = arith.constant 0 : i32
    return %c0_i32, %c0_i32_0 : i32, i32
  }
  func.func @transform_3(%arg0: i32) -> (i32, i32) {
    %c0_i32 = arith.constant 0 : i32
    %c0_i32_0 = arith.constant 0 : i32
    return %arg0, %c0_i32 : i32, i32
  }
  func.func @transform_4(%arg0: i32) -> (i32, i32, i32) {
    %c0_i32 = arith.constant 0 : i32
    %c0_i32_0 = arith.constant 0 : i32
    %c0_i32_1 = arith.constant 0 : i32
    return %arg0, %c0_i32, %c0_i32_0 : i32, i32, i32
  }
  func.func @transform_5(%arg0: i32) -> (i32, i32, i32) {
    %c0_i32 = arith.constant 0 : i32
    %c0_i32_0 = arith.constant 0 : i32
    %c0_i32_1 = arith.constant 0 : i32
    return %arg0, %c0_i32, %c0_i32_0 : i32, i32, i32
  }
}

module attributes {stable_mosaic.version = 11 : i64} {
  func.func @kernel(%arg0: i32, %arg1: memref<32x544xf32, #tpu.memory_space<vmem>>, %arg2: memref<32x544xf32, #tpu.memory_space<vmem>>, %arg3: memref<1x544xf32, #tpu.memory_space<vmem>>, %arg4: memref<1x544xf32, #tpu.memory_space<vmem>>, %arg5: memref<32x544xf32, #tpu.memory_space<vmem>>) attributes {dimension_semantics = [#tpu.dimension_semantics<parallel>], iteration_bounds = array<i64: 4>, scalar_prefetch = 0 : i64, scratch_operands = 0 : i64, tpu.core_type = #tpu.core_type<tc>, window_params = [{transform_indices = @transform_0, window_bounds = array<i64: 32, 544>}, {transform_indices = @transform_1, window_bounds = array<i64: 32, 544>}, {pipeline_mode = #tpu.pipeline_mode<synchronous>, transform_indices = @transform_2, window_bounds = array<i64: 1, 544>}, {pipeline_mode = #tpu.pipeline_mode<synchronous>, transform_indices = @transform_3, window_bounds = array<i64: 1, 544>}, {transform_indices = @transform_4, window_bounds = array<i64: 32, 544>}]} {
    %c0 = arith.constant 0 : index
    %c0_0 = arith.constant 0 : index
    %0 = vector.load %arg1[%c0, %c0_0] : memref<32x544xf32, #tpu.memory_space<vmem>>, vector<32x544xf32>
    %c0_1 = arith.constant 0 : index
    %c0_2 = arith.constant 0 : index
    %1 = vector.load %arg3[%c0_1, %c0_2] : memref<1x544xf32, #tpu.memory_space<vmem>>, vector<1x544xf32>
    %2 = vector.broadcast %1 : vector<1x544xf32> to vector<32x544xf32>
    %3 = arith.mulf %0, %2 : vector<32x544xf32>
    %c0_3 = arith.constant 0 : index
    %c0_4 = arith.constant 0 : index
    %4 = vector.load %arg4[%c0_3, %c0_4] : memref<1x544xf32, #tpu.memory_space<vmem>>, vector<1x544xf32>
    %5 = vector.broadcast %4 : vector<1x544xf32> to vector<32x544xf32>
    %6 = arith.addf %3, %5 : vector<32x544xf32>
    %c0_5 = arith.constant 0 : index
    %c0_6 = arith.constant 0 : index
    %7 = vector.load %arg2[%c0_5, %c0_6] : memref<32x544xf32, #tpu.memory_space<vmem>>, vector<32x544xf32>
    %8 = arith.addf %6, %7 : vector<32x544xf32>
    %cst = arith.constant 0.000000e+00 : f32
    %9 = vector.broadcast %cst : f32 to vector<32x544xf32>
    %10 = arith.maximumf %8, %9 : vector<32x544xf32>
    %c0_7 = arith.constant 0 : index
    %c0_8 = arith.constant 0 : index
    %11 = vector.load %arg5[%c0_7, %c0_8] : memref<32x544xf32, #tpu.memory_space<vmem>>, vector<32x544xf32>
    tpu.vector_store %arg5[%c0_7, %c0_8], %10 {strides = array<i32>} : memref<32x544xf32, #tpu.memory_space<vmem>>, vector<32x544xf32>,
    return
  }
  func.func @transform_0(%arg0: i32) -> (i32, i32) {
    %c0_i32 = arith.constant 0 : i32
    %c0_i32_0 = arith.constant 0 : i32
    return %arg0, %c0_i32 : i32, i32
  }
  func.func @transform_1(%arg0: i32) -> (i32, i32) {
    %c0_i32 = arith.constant 0 : i32
    %c0_i32_0 = arith.constant 0 : i32
    return %arg0, %c0_i32 : i32, i32
  }
  func.func @transform_2(%arg0: i32) -> (i32, i32) {
    %c0_i32 = arith.constant 0 : i32
    %c0_i32_0 = arith.constant 0 : i32
    %c0_i32_1 = arith.constant 0 : i32
    return %c0_i32, %c0_i32_0 : i32, i32
  }
  func.func @transform_3(%arg0: i32) -> (i32, i32) {
    %c0_i32 = arith.constant 0 : i32
    %c0_i32_0 = arith.constant 0 : i32
    %c0_i32_1 = arith.constant 0 : i32
    return %c0_i32, %c0_i32_0 : i32, i32
  }
  func.func @transform_4(%arg0: i32) -> (i32, i32) {
    %c0_i32 = arith.constant 0 : i32
    %c0_i32_0 = arith.constant 0 : i32
    return %arg0, %c0_i32 : i32, i32
  }
}

</mosaic_0001>

<llo_original>
// kernel: _lambda_.3
$region0: #{_lambda_.3}
  #allocation0 [shape = 'u32[]', space=smem, size = 0x4, offset = 0x4, fixed_abs, tag = 'smem constant byte address 0x4 - core index']
  #allocation1 [shape = 'u32[144,128]{1,0:T(1,128)}', space=vmem, size = 0x12000, scoped, tag = 'internal scratch']
  %s0 = inlined_call_operand.vmem [shape: f32[128,544], index: 0, kind: input, shape index: {}, may-alias: {0,4}]
  %s1 = inlined_call_operand.vmem [shape: f32[128,544], index: 1, kind: input, shape index: {}]
  %s2 = inlined_call_operand.vmem [shape: f32[1,544], index: 2, kind: input, shape index: {}]
  %s3 = inlined_call_operand.vmem [shape: f32[1,544], index: 3, kind: input, shape index: {}]
  %s4 = inlined_call_operand.vmem [shape: f32[128,544], index: 4, kind: output, shape index: {}, may-alias: {0,4}]
  %s5 = sld [smem:[#allocation0]]
  $region49: #{_lambda_.3} parent=0
    _
  %s7 = ssub.s32 1, %s5
  %s8 = scalar_select 0, %s7, %s5
  loop: start=0, step=1, limit=6
  $region2: #{_lambda_.3} parent=0 // loop_pre_header
    _
  $region3: #{_lambda_.3} parent=0 // loop_header
    %s10 = sphi 0, %s14
    %p11 = scmp.ge.s32.totalorder %s10, 6
    %s20 = sphi 0, %s22
    %s23 = sphi 0, %s20
    %s24 = sphi 0, %s23
    %s40 = sphi 0, %s24
    %s46 = sphi 0, %s48
    %s49 = sphi 0, %s46
    %s50 = sphi 0, %s49
    %s66 = sphi 0, %s50
    %s70 = sphi 0, %s70
    %s72 = sphi 0, %s70
    %s73 = sphi 0, %s72
    %s87 = sphi 0, %s73
    %s91 = sphi 0, %s91
    %s93 = sphi 0, %s91
    %s94 = sphi 0, %s93
    %s108 = sphi 0, %s94
    %s114 = sphi 0, %s116
    %s117 = sphi 0, %s114
    %s118 = sphi 0, %s117
    %s134 = sphi 0, %s118
  $region4: #{_lambda_.3} parent=0 // loop_header_branch
    %13 = sbr.rel (%p11) target = $region8
  $region5: #{_lambda_.3} parent=0 // loop_body
    %s15 = ssub.s32 %s10, 1
    %s16 = ssub.s32 %s10, 2
    %s17 = sadd.s32 %s10, 1
    %s18 = ssub.s32 %s10, %s17
    %p19 = scmp.eq.s32.totalorder %s18, 0
    %s21 = sadd.s32 %s20, 1
    %s22 = scalar_select %p19, %s20, %s21
    %p25 = pneg %p19
    %p26 = scmp.eq.s32.totalorder %s10, 3
    %p27 = por %p25, %p26
    %p28 = scmp.ne.s32.totalorder %s20, %s23
    %p29 = scmp.eq.s32.totalorder %s10, 0
    %p30 = por %p28, %p29
    %p31 = scmp.ne.s32.totalorder %s20, %s23
    %p32 = scmp.eq.s32.totalorder %s15, 3
    %p33 = por %p31, %p32
    %p34 = scmp.ne.s32.totalorder %s23, %s24
    %p35 = scmp.eq.s32.totalorder %s15, 0
    %p36 = por %p34, %p35
    %p37 = scmp.ne.s32.totalorder %s23, %s24
    %p38 = scmp.eq.s32.totalorder %s16, 3
    %p39 = por %p37, %p38
    %p41 = scmp.ne.s32.totalorder %s24, %s40
    %p42 = scmp.eq.s32.totalorder %s16, 0
    %p43 = por %p41, %p42
    %s44 = ssub.s32 %s10, %s17
    %p45 = scmp.eq.s32.totalorder %s44, 0
    %s47 = sadd.s32 %s46, 1
    %s48 = scalar_select %p45, %s46, %s47
    %p51 = pneg %p45
    %p52 = scmp.eq.s32.totalorder %s10, 3
    %p53 = por %p51, %p52
    %p54 = scmp.ne.s32.totalorder %s46, %s49
    %p55 = scmp.eq.s32.totalorder %s10, 0
    %p56 = por %p54, %p55
    %p57 = scmp.ne.s32.totalorder %s46, %s49
    %p58 = scmp.eq.s32.totalorder %s15, 3
    %p59 = por %p57, %p58
    %p60 = scmp.ne.s32.totalorder %s49, %s50
    %p61 = scmp.eq.s32.totalorder %s15, 0
    %p62 = por %p60, %p61
    %p63 = scmp.ne.s32.totalorder %s49, %s50
    %p64 = scmp.eq.s32.totalorder %s16, 3
    %p65 = por %p63, %p64
    %p67 = scmp.ne.s32.totalorder %s50, %s66
    %p68 = scmp.eq.s32.totalorder %s16, 0
    %p69 = por %p67, %p68
    %s71 = sadd.s32 %s70, 1
    %p74 = scmp.eq.s32.totalorder %s10, 3
    %p75 = scmp.ne.s32.totalorder %s70, %s72
    %p76 = scmp.eq.s32.totalorder %s10, 0
    %p77 = por %p75, %p76
    %p78 = scmp.ne.s32.totalorder %s70, %s72
    %p79 = scmp.eq.s32.totalorder %s15, 3
    %p80 = por %p78, %p79
    %p81 = scmp.ne.s32.totalorder %s72, %s73
    %p82 = scmp.eq.s32.totalorder %s15, 0
    %p83 = por %p81, %p82
    %p84 = scmp.ne.s32.totalorder %s72, %s73
    %p85 = scmp.eq.s32.totalorder %s16, 3
    %p86 = por %p84, %p85
    %p88 = scmp.ne.s32.totalorder %s73, %s87
    %p89 = scmp.eq.s32.totalorder %s16, 0
    %p90 = por %p88, %p89
    %s92 = sadd.s32 %s91, 1
    %p95 = scmp.eq.s32.totalorder %s10, 3
    %p96 = scmp.ne.s32.totalorder %s91, %s93
    %p97 = scmp.eq.s32.totalorder %s10, 0
    %p98 = por %p96, %p97
    %p99 = scmp.ne.s32.totalorder %s91, %s93
    %p100 = scmp.eq.s32.totalorder %s15, 3
    %p101 = por %p99, %p100
    %p102 = scmp.ne.s32.totalorder %s93, %s94
    %p103 = scmp.eq.s32.totalorder %s15, 0
    %p104 = por %p102, %p103
    %p105 = scmp.ne.s32.totalorder %s93, %s94
    %p106 = scmp.eq.s32.totalorder %s16, 3
    %p107 = por %p105, %p106
    %p109 = scmp.ne.s32.totalorder %s94, %s108
    %p110 = scmp.eq.s32.totalorder %s16, 0
    %p111 = por %p109, %p110
    %s112 = ssub.s32 %s10, %s17
    %p113 = scmp.eq.s32.totalorder %s112, 0
    %s115 = sadd.s32 %s114, 1
    %s116 = scalar_select %p113, %s114, %s115
    %p119 = pneg %p113
    %p120 = scmp.eq.s32.totalorder %s10, 3
    %p121 = por %p119, %p120
    %p122 = scmp.ne.s32.totalorder %s114, %s117
    %p123 = scmp.eq.s32.totalorder %s10, 0
    %p124 = por %p122, %p123
    %p125 = scmp.ne.s32.totalorder %s114, %s117
    %p126 = scmp.eq.s32.totalorder %s15, 3
    %p127 = por %p125, %p126
    %p128 = scmp.ne.s32.totalorder %s117, %s118
    %p129 = scmp.eq.s32.totalorder %s15, 0
    %p130 = por %p128, %p129
    %p131 = scmp.ne.s32.totalorder %s117, %s118
    %p132 = scmp.eq.s32.totalorder %s16, 3
    %p133 = por %p131, %p132
    %p135 = scmp.ne.s32.totalorder %s118, %s134
    %p136 = scmp.eq.s32.totalorder %s16, 0
    %p137 = por %p135, %p136
    %p138 = scmp.le.s32.totalorder 1, %s10
    %p139 = scmp.lt.s32.totalorder %s10, 5
    %p140 = pnand %p138, %p139
    %p141 = pneg %p140
    // Predicated region
    $region9: #{_lambda_.3} parent=5 // pred_check
      _
    $region10: #{_lambda_.3} parent=5 // pred_check_branch
      %143 = sbr.rel (%p140) target = $region12
    $region11: #{_lambda_.3} parent=5 // pred_region
      %s144 = ssub.s32 %s10, 1
      // Predicated region
      $region13: #{_lambda_.3} parent=11 // pred_check
        %p145 = pneg %p83
      $region14: #{_lambda_.3} parent=11 // pred_check_branch
        %147 = sbr.rel (%p145) target = $region16
      $region15: #{_lambda_.3} parent=11 // pred_region
        _
      $region16: #{_lambda_.3} parent=11 // pred_fallthru
        _
      // Predicated region
      $region17: #{_lambda_.3} parent=11 // pred_check
        %p148 = pneg %p104
      $region18: #{_lambda_.3} parent=11 // pred_check_branch
        %150 = sbr.rel (%p148) target = $region20
      $region19: #{_lambda_.3} parent=11 // pred_region
        _
      $region20: #{_lambda_.3} parent=11 // pred_fallthru
        _
    $region12: #{_lambda_.3} parent=5 // pred_fallthru
      _
    %p151 = scmp.lt.s32.totalorder %s10, 4
    // Predicated region
    $region21: #{_lambda_.3} parent=5 // pred_check
      %p152 = pneg %p151
    $region22: #{_lambda_.3} parent=5 // pred_check_branch
      %154 = sbr.rel (%p152) target = $region24
    $region23: #{_lambda_.3} parent=5 // pred_region
      // Predicated region
      $region25: #{_lambda_.3} parent=23 // pred_check
        %p155 = pneg %p30
      $region26: #{_lambda_.3} parent=23 // pred_check_branch
        %157 = sbr.rel (%p155) target = $region28
      $region27: #{_lambda_.3} parent=23 // pred_region
        %s158 = smul.u32 4, %s10
        %p159 = scmp.lt.s32.totalorder %s158, 15
        %s160 = scalar_select %p159, %s158, 15
        %s161 = smul.addr %s160, 5
        %s162 = smul.addr %s161, 8
        %s163 = scalar_lea.vmem %s0, %s162
        %s164 = smul.u32 4, %s10
      $region28: #{_lambda_.3} parent=23 // pred_fallthru
        _
      // Predicated region
      $region29: #{_lambda_.3} parent=23 // pred_check
        %p165 = pneg %p56
      $region30: #{_lambda_.3} parent=23 // pred_check_branch
        %167 = sbr.rel (%p165) target = $region32
      $region31: #{_lambda_.3} parent=23 // pred_region
        %s168 = smul.u32 4, %s10
        %p169 = scmp.lt.s32.totalorder %s168, 15
        %s170 = scalar_select %p169, %s168, 15
        %s171 = smul.addr %s170, 5
        %s172 = smul.addr %s171, 8
        %s173 = scalar_lea.vmem %s1, %s172
        %s174 = smul.u32 4, %s10
      $region32: #{_lambda_.3} parent=23 // pred_fallthru
        _
    $region24: #{_lambda_.3} parent=5 // pred_fallthru
      _
    %p175 = scmp.le.s32.totalorder 1, %s10
    %p176 = scmp.lt.s32.totalorder %s10, 5
    %p177 = pnand %p175, %p176
    %p178 = pneg %p177
    // Predicated region
    $region33: #{_lambda_.3} parent=5 // pred_check
      _
    $region34: #{_lambda_.3} parent=5 // pred_check_branch
      %180 = sbr.rel (%p177) target = $region36
    $region35: #{_lambda_.3} parent=5 // pred_region
      %s181 = ssub.s32 %s10, 1
      %s182 = smul.u32 4, %s15
      %p183 = scmp.lt.s32.totalorder %s182, 15
      %s184 = scalar_select %p183, %s182, 15
      %s185 = smul.addr %s184, 5
      %s186 = smul.addr %s185, 8
      %s187 = scalar_lea.vmem %s0, %s186
      %p188 = pneg %p36
      %p189 = pneg %p33
      %s190 = smul.u32 4, %s15
      %p191 = scmp.lt.s32.totalorder %s190, 15
      %s192 = scalar_select %p191, %s190, 15
      %s193 = smul.addr %s192, 5
      %s194 = smul.addr %s193, 8
      %s195 = scalar_lea.vmem %s1, %s194
      %p196 = pneg %p62
      %p197 = pneg %p59
      %p198 = pneg %p83
      %p199 = pneg %p80
      %p200 = pneg %p104
      %p201 = pneg %p101
      %p202 = pneg %p130
      %p203 = pneg %p127
      %s204 = smul.u32 4, %s15
      %p205 = scmp.lt.s32.totalorder %s204, 15
      %s206 = scalar_select %p205, %s204, 15
      %s207 = smul.addr %s206, 5
      %s208 = smul.addr %s207, 8
      %s209 = scalar_lea.vmem %s4, %s208
      %s210 = smul.u32 4, %s15
      %p211 = scmp.lt.s32.totalorder %s210, 15
      %s212 = scalar_select %p211, %s210, 15
      %s213 = smul.addr %s212, 5
      %s214 = smul.addr %s213, 8
      %s215 = scalar_lea.vmem %s0, %s214
      %s216 = smul.u32 4, %s15
      %s217 = smul.u32 4, %s15
      %p218 = scmp.lt.s32.totalorder %s217, 15
      %s219 = scalar_select %p218, %s217, 15
      %s220 = smul.addr %s219, 5
      %s221 = smul.addr %s220, 8
      %s222 = scalar_lea.vmem %s1, %s221
      %s223 = smul.u32 4, %s15
      %s224 = smul.u32 4, %s15
      %p225 = scmp.lt.s32.totalorder %s224, 15
      %s226 = scalar_select %p225, %s224, 15
      %s227 = smul.addr %s226, 5
      %s228 = smul.addr %s227, 8
      %s229 = scalar_lea.vmem %s4, %s228
      %s230 = smul.u32 4, %s15
      %v231 = vld [vmem:[%s215] sm:$0xff]
      %v232 = vld [vmem:[%s215 + $0x8] sm:$0xff]
      %v233 = vld [vmem:[%s215 + $0x10] sm:$0xff]
      %v234 = vld [vmem:[%s215 + $0x18] sm:$0xff]
      %v235 = vld [vmem:[%s215 + $0x20] sm:$0xff]
      %v236 = vld [vmem:[%s215 + $0x28] sm:$0xff]
      %v237 = vld [vmem:[%s215 + $0x30] sm:$0xff]
      %v238 = vld [vmem:[%s215 + $0x38] sm:$0xff]
      %v239 = vld [vmem:[%s215 + $0x40] sm:$0xff]
      %v240 = vld [vmem:[%s215 + $0x48] sm:$0xff]
      %v241 = vld [vmem:[%s215 + $0x50] sm:$0xff]
      %v242 = vld [vmem:[%s215 + $0x58] sm:$0xff]
      %v243 = vld [vmem:[%s215 + $0x60] sm:$0xff]
      %v244 = vld [vmem:[%s215 + $0x68] sm:$0xff]
      %v245 = vld [vmem:[%s215 + $0x70] sm:$0xff]
      %v246 = vld [vmem:[%s215 + $0x78] sm:$0xff]
      %v247 = vld [vmem:[%s215 + $0x80] sm:$0xff]
      %v248 = vld [vmem:[%s215 + $0x88] sm:$0xff]
      %v249 = vld [vmem:[%s215 + $0x90] sm:$0xff]
      %v250 = vld [vmem:[%s215 + $0x98] sm:$0xff]
      %v251 = vld [vmem:[%s2] sm:$0x1f]
      %v253 = vlaneseq
      %v254 = vshrl.u32 %v253, 7
      %v255 = vsub.s32 0, %v254
      %v256 = vrot.slane %v251, %v255
      %v257 = vlaneseq
      %v258 = vshrl.u32 %v257, 7
      %v259 = vsub.s32 1, %v258
      %v260 = vrot.slane %v251, %v259
      %v261 = vlaneseq
      %v262 = vshrl.u32 %v261, 7
      %v263 = vsub.s32 2, %v262
      %v264 = vrot.slane %v251, %v263
      %v265 = vlaneseq
      %v266 = vshrl.u32 %v265, 7
      %v267 = vsub.s32 3, %v266
      %v268 = vrot.slane %v251, %v267
      %v269 = vlaneseq
      %v270 = vshrl.u32 %v269, 7
      %v271 = vsub.s32 4, %v270
      %v272 = vrot.slane %v251, %v271
      %v278 = vmul.f32 %v231, %v256
      %v279 = vmul.f32 %v232, %v260
      %v280 = vmul.f32 %v233, %v264
      %v281 = vmul.f32 %v234, %v268
      %v282 = vmul.f32 %v235, %v272
      %v283 = vmul.f32 %v236, %v256
      %v284 = vmul.f32 %v237, %v260
      %v285 = vmul.f32 %v238, %v264
      %v286 = vmul.f32 %v239, %v268
      %v287 = vmul.f32 %v240, %v272
      %v288 = vmul.f32 %v241, %v256
      %v289 = vmul.f32 %v242, %v260
      %v290 = vmul.f32 %v243, %v264
      %v291 = vmul.f32 %v244, %v268
      %v292 = vmul.f32 %v245, %v272
      %v293 = vmul.f32 %v246, %v256
      %v294 = vmul.f32 %v247, %v260
      %v295 = vmul.f32 %v248, %v264
      %v296 = vmul.f32 %v249, %v268
      %v297 = vmul.f32 %v250, %v272
      %v298 = vld [vmem:[%s3] sm:$0x1f]
      %v300 = vlaneseq
      %v301 = vshrl.u32 %v300, 7
      %v302 = vsub.s32 0, %v301
      %v303 = vrot.slane %v298, %v302
      %v304 = vlaneseq
      %v305 = vshrl.u32 %v304, 7
      %v306 = vsub.s32 1, %v305
      %v307 = vrot.slane %v298, %v306
      %v308 = vlaneseq
      %v309 = vshrl.u32 %v308, 7
      %v310 = vsub.s32 2, %v309
      %v311 = vrot.slane %v298, %v310
      %v312 = vlaneseq
      %v313 = vshrl.u32 %v312, 7
      %v314 = vsub.s32 3, %v313
      %v315 = vrot.slane %v298, %v314
      %v316 = vlaneseq
      %v317 = vshrl.u32 %v316, 7
      %v318 = vsub.s32 4, %v317
      %v319 = vrot.slane %v298, %v318
      %v325 = vadd.f32 %v278, %v303
      %v326 = vadd.f32 %v279, %v307
      %v327 = vadd.f32 %v280, %v311
      %v328 = vadd.f32 %v281, %v315
      %v329 = vadd.f32 %v282, %v319
      %v330 = vadd.f32 %v283, %v303
      %v331 = vadd.f32 %v284, %v307
      %v332 = vadd.f32 %v285, %v311
      %v333 = vadd.f32 %v286, %v315
      %v334 = vadd.f32 %v287, %v319
      %v335 = vadd.f32 %v288, %v303
      %v336 = vadd.f32 %v289, %v307
      %v337 = vadd.f32 %v290, %v311
      %v338 = vadd.f32 %v291, %v315
      %v339 = vadd.f32 %v292, %v319
      %v340 = vadd.f32 %v293, %v303
      %v341 = vadd.f32 %v294, %v307
      %v342 = vadd.f32 %v295, %v311
      %v343 = vadd.f32 %v296, %v315
      %v344 = vadd.f32 %v297, %v319
      %v345 = vld [vmem:[%s222] sm:$0xff]
      %v346 = vld [vmem:[%s222 + $0x8] sm:$0xff]
      %v347 = vld [vmem:[%s222 + $0x10] sm:$0xff]
      %v348 = vld [vmem:[%s222 + $0x18] sm:$0xff]
      %v349 = vld [vmem:[%s222 + $0x20] sm:$0xff]
      %v350 = vld [vmem:[%s222 + $0x28] sm:$0xff]
      %v351 = vld [vmem:[%s222 + $0x30] sm:$0xff]
      %v352 = vld [vmem:[%s222 + $0x38] sm:$0xff]
      %v353 = vld [vmem:[%s222 + $0x40] sm:$0xff]
      %v354 = vld [vmem:[%s222 + $0x48] sm:$0xff]
      %v355 = vld [vmem:[%s222 + $0x50] sm:$0xff]
      %v356 = vld [vmem:[%s222 + $0x58] sm:$0xff]
      %v357 = vld [vmem:[%s222 + $0x60] sm:$0xff]
      %v358 = vld [vmem:[%s222 + $0x68] sm:$0xff]
      %v359 = vld [vmem:[%s222 + $0x70] sm:$0xff]
      %v360 = vld [vmem:[%s222 + $0x78] sm:$0xff]
      %v361 = vld [vmem:[%s222 + $0x80] sm:$0xff]
      %v362 = vld [vmem:[%s222 + $0x88] sm:$0xff]
      %v363 = vld [vmem:[%s222 + $0x90] sm:$0xff]
      %v364 = vld [vmem:[%s222 + $0x98] sm:$0xff]
      %v365 = vadd.f32 %v325, %v345
      %v366 = vadd.f32 %v326, %v346
      %v367 = vadd.f32 %v327, %v347
      %v368 = vadd.f32 %v328, %v348
      %v369 = vadd.f32 %v329, %v349
      %v370 = vadd.f32 %v330, %v350
      %v371 = vadd.f32 %v331, %v351
      %v372 = vadd.f32 %v332, %v352
      %v373 = vadd.f32 %v333, %v353
      %v374 = vadd.f32 %v334, %v354
      %v375 = vadd.f32 %v335, %v355
      %v376 = vadd.f32 %v336, %v356
      %v377 = vadd.f32 %v337, %v357
      %v378 = vadd.f32 %v338, %v358
      %v379 = vadd.f32 %v339, %v359
      %v380 = vadd.f32 %v340, %v360
      %v381 = vadd.f32 %v341, %v361
      %v382 = vadd.f32 %v342, %v362
      %v383 = vadd.f32 %v343, %v363
      %v384 = vadd.f32 %v344, %v364
      %v385 = vmax.f32 %v365, 0.0
      %v386 = vmax.f32 %v366, 0.0
      %v387 = vmax.f32 %v367, 0.0
      %v388 = vmax.f32 %v368, 0.0
      %v389 = vmax.f32 %v369, 0.0
      %v390 = vmax.f32 %v370, 0.0
      %v391 = vmax.f32 %v371, 0.0
      %v392 = vmax.f32 %v372, 0.0
      %v393 = vmax.f32 %v373, 0.0
      %v394 = vmax.f32 %v374, 0.0
      %v395 = vmax.f32 %v375, 0.0
      %v396 = vmax.f32 %v376, 0.0
      %v397 = vmax.f32 %v377, 0.0
      %v398 = vmax.f32 %v378, 0.0
      %v399 = vmax.f32 %v379, 0.0
      %v400 = vmax.f32 %v380, 0.0
      %v401 = vmax.f32 %v381, 0.0
      %v402 = vmax.f32 %v382, 0.0
      %v403 = vmax.f32 %v383, 0.0
      %v404 = vmax.f32 %v384, 0.0
      %405 = vst [vmem:[%s229] sm:$0xff] %v385
      %406 = vst [vmem:[%s229 + $0x8] sm:$0xff] %v386
      %407 = vst [vmem:[%s229 + $0x10] sm:$0xff] %v387
      %408 = vst [vmem:[%s229 + $0x18] sm:$0xff] %v388
      %vm409 = vcmask 261120
      %410 = vst.msk [vmem:[%s229 + $0x20] sm:$0xff] %vm409, %v389
      %411 = vst [vmem:[%s229 + $0x28] sm:$0xff] %v390
      %412 = vst [vmem:[%s229 + $0x30] sm:$0xff] %v391
      %413 = vst [vmem:[%s229 + $0x38] sm:$0xff] %v392
      %414 = vst [vmem:[%s229 + $0x40] sm:$0xff] %v393
      %415 = vst.msk [vmem:[%s229 + $0x48] sm:$0xff] %vm409, %v394
      %416 = vst [vmem:[%s229 + $0x50] sm:$0xff] %v395
      %417 = vst [vmem:[%s229 + $0x58] sm:$0xff] %v396
      %418 = vst [vmem:[%s229 + $0x60] sm:$0xff] %v397
      %419 = vst [vmem:[%s229 + $0x68] sm:$0xff] %v398
      %420 = vst.msk [vmem:[%s229 + $0x70] sm:$0xff] %vm409, %v399
      %421 = vst [vmem:[%s229 + $0x78] sm:$0xff] %v400
      %422 = vst [vmem:[%s229 + $0x80] sm:$0xff] %v401
      %423 = vst [vmem:[%s229 + $0x88] sm:$0xff] %v402
      %424 = vst [vmem:[%s229 + $0x90] sm:$0xff] %v403
      %425 = vst.msk [vmem:[%s229 + $0x98] sm:$0xff] %vm409, %v404
      %s426 = smul.u32 4, %s15
      %p427 = scmp.lt.s32.totalorder %s426, 15
      %s428 = scalar_select %p427, %s426, 15
      %s429 = smul.addr %s428, 5
      %s430 = smul.addr %s429, 8
      %s431 = scalar_lea.vmem %s4, %s430
      // Predicated region
      $region37: #{_lambda_.3} parent=35 // pred_check
        %p432 = pneg %p127
      $region38: #{_lambda_.3} parent=35 // pred_check_branch
        %434 = sbr.rel (%p432) target = $region40
      $region39: #{_lambda_.3} parent=35 // pred_region
        %s435 = smul.u32 4, %s15
      $region40: #{_lambda_.3} parent=35 // pred_fallthru
        _
    $region36: #{_lambda_.3} parent=5 // pred_fallthru
      _
    %p436 = scmp.le.s32.totalorder 2, %s10
    // Predicated region
    $region41: #{_lambda_.3} parent=5 // pred_check
      %p437 = pneg %p436
    $region42: #{_lambda_.3} parent=5 // pred_check_branch
      %439 = sbr.rel (%p437) target = $region44
    $region43: #{_lambda_.3} parent=5 // pred_region
      %s440 = ssub.s32 %s10, 2
      // Predicated region
      $region45: #{_lambda_.3} parent=43 // pred_check
        %p441 = pneg %p133
      $region46: #{_lambda_.3} parent=43 // pred_check_branch
        %443 = sbr.rel (%p441) target = $region48
      $region47: #{_lambda_.3} parent=43 // pred_region
        %s444 = smul.u32 4, %s16
        %p445 = scmp.lt.s32.totalorder %s444, 15
        %s446 = scalar_select %p445, %s444, 15
        %s447 = smul.addr %s446, 5
        %s448 = smul.addr %s447, 8
        %s449 = scalar_lea.vmem %s4, %s448
      $region48: #{_lambda_.3} parent=43 // pred_fallthru
        _
    $region44: #{_lambda_.3} parent=5 // pred_fallthru
      _
  $region6: #{_lambda_.3} parent=0 // loop_footer
    %s14 = sadd.s32 1, %s10
  $region7: #{_lambda_.3} parent=0 // loop_footer_branch
    %9 = sbr.rel target = $region3
  $region8: #{_lambda_.3} parent=0 // loop_exit
    _

// kernel: _lambda_.2
$region0: #{_lambda_.2}
  #allocation0 [shape = 'u32[]', space=smem, size = 0x4, offset = 0x4, fixed_abs, tag = 'smem constant byte address 0x4 - core index']
  #allocation1 [shape = 'u32[144,128]{1,0:T(1,128)}', space=vmem, size = 0x12000, scoped, tag = 'internal scratch']
  %s0 = inlined_call_operand.vmem [shape: f32[128,544], index: 0, kind: input, shape index: {}]
  %s1 = inlined_call_operand.vmem [shape: f32[544,544], index: 1, kind: input, shape index: {}]
  %s2 = inlined_call_operand.vmem [shape: f32[1,544], index: 2, kind: input, shape index: {}]
  %s3 = inlined_call_operand.vmem [shape: f32[128,544], index: 3, kind: output, shape index: {0}]
  %s4 = inlined_call_operand.vmem [shape: f32[4,1,544], index: 4, kind: output, shape index: {1}]
  %s5 = inlined_call_operand.vmem [shape: f32[4,1,544], index: 5, kind: output, shape index: {2}]
  %6 = xla_tuple %s3, %s4, %s5
  %s7 = sld [smem:[#allocation0]]
  $region61: #{_lambda_.2} parent=0
    _
  %s9 = ssub.s32 1, %s7
  %s10 = scalar_select 0, %s9, %s7
  loop: start=0, step=1, limit=6
  $region2: #{_lambda_.2} parent=0 // loop_pre_header
    _
  $region3: #{_lambda_.2} parent=0 // loop_header
    %s12 = sphi 0, %s16
    %p13 = scmp.ge.s32.totalorder %s12, 6
    %s22 = sphi 0, %s24
    %s25 = sphi 0, %s22
    %s26 = sphi 0, %s25
    %s42 = sphi 0, %s26
    %s46 = sphi 0, %s46
    %s48 = sphi 0, %s46
    %s49 = sphi 0, %s48
    %s63 = sphi 0, %s49
    %s67 = sphi 0, %s67
    %s69 = sphi 0, %s67
    %s70 = sphi 0, %s69
    %s84 = sphi 0, %s70
    %s90 = sphi 0, %s92
    %s93 = sphi 0, %s90
    %s94 = sphi 0, %s93
    %s110 = sphi 0, %s94
    %s116 = sphi 0, %s118
    %s119 = sphi 0, %s116
    %s120 = sphi 0, %s119
    %s136 = sphi 0, %s120
    %s142 = sphi 0, %s144
    %s145 = sphi 0, %s142
    %s146 = sphi 0, %s145
    %s162 = sphi 0, %s146
  $region4: #{_lambda_.2} parent=0 // loop_header_branch
    %15 = sbr.rel (%p13) target = $region8
  $region5: #{_lambda_.2} parent=0 // loop_body
    %s17 = ssub.s32 %s12, 1
    %s18 = ssub.s32 %s12, 2
    %s19 = sadd.s32 %s12, 1
    %s20 = ssub.s32 %s12, %s19
    %p21 = scmp.eq.s32.totalorder %s20, 0
    %s23 = sadd.s32 %s22, 1
    %s24 = scalar_select %p21, %s22, %s23
    %p27 = pneg %p21
    %p28 = scmp.eq.s32.totalorder %s12, 3
    %p29 = por %p27, %p28
    %p30 = scmp.ne.s32.totalorder %s22, %s25
    %p31 = scmp.eq.s32.totalorder %s12, 0
    %p32 = por %p30, %p31
    %p33 = scmp.ne.s32.totalorder %s22, %s25
    %p34 = scmp.eq.s32.totalorder %s17, 3
    %p35 = por %p33, %p34
    %p36 = scmp.ne.s32.totalorder %s25, %s26
    %p37 = scmp.eq.s32.totalorder %s17, 0
    %p38 = por %p36, %p37
    %p39 = scmp.ne.s32.totalorder %s25, %s26
    %p40 = scmp.eq.s32.totalorder %s18, 3
    %p41 = por %p39, %p40
    %p43 = scmp.ne.s32.totalorder %s26, %s42
    %p44 = scmp.eq.s32.totalorder %s18, 0
    %p45 = por %p43, %p44
    %s47 = sadd.s32 %s46, 1
    %p50 = scmp.eq.s32.totalorder %s12, 3
    %p51 = scmp.ne.s32.totalorder %s46, %s48
    %p52 = scmp.eq.s32.totalorder %s12, 0
    %p53 = por %p51, %p52
    %p54 = scmp.ne.s32.totalorder %s46, %s48
    %p55 = scmp.eq.s32.totalorder %s17, 3
    %p56 = por %p54, %p55
    %p57 = scmp.ne.s32.totalorder %s48, %s49
    %p58 = scmp.eq.s32.totalorder %s17, 0
    %p59 = por %p57, %p58
    %p60 = scmp.ne.s32.totalorder %s48, %s49
    %p61 = scmp.eq.s32.totalorder %s18, 3
    %p62 = por %p60, %p61
    %p64 = scmp.ne.s32.totalorder %s49, %s63
    %p65 = scmp.eq.s32.totalorder %s18, 0
    %p66 = por %p64, %p65
    %s68 = sadd.s32 %s67, 1
    %p71 = scmp.eq.s32.totalorder %s12, 3
    %p72 = scmp.ne.s32.totalorder %s67, %s69
    %p73 = scmp.eq.s32.totalorder %s12, 0
    %p74 = por %p72, %p73
    %p75 = scmp.ne.s32.totalorder %s67, %s69
    %p76 = scmp.eq.s32.totalorder %s17, 3
    %p77 = por %p75, %p76
    %p78 = scmp.ne.s32.totalorder %s69, %s70
    %p79 = scmp.eq.s32.totalorder %s17, 0
    %p80 = por %p78, %p79
    %p81 = scmp.ne.s32.totalorder %s69, %s70
    %p82 = scmp.eq.s32.totalorder %s18, 3
    %p83 = por %p81, %p82
    %p85 = scmp.ne.s32.totalorder %s70, %s84
    %p86 = scmp.eq.s32.totalorder %s18, 0
    %p87 = por %p85, %p86
    %s88 = ssub.s32 %s12, %s19
    %p89 = scmp.eq.s32.totalorder %s88, 0
    %s91 = sadd.s32 %s90, 1
    %s92 = scalar_select %p89, %s90, %s91
    %p95 = pneg %p89
    %p96 = scmp.eq.s32.totalorder %s12, 3
    %p97 = por %p95, %p96
    %p98 = scmp.ne.s32.totalorder %s90, %s93
    %p99 = scmp.eq.s32.totalorder %s12, 0
    %p100 = por %p98, %p99
    %p101 = scmp.ne.s32.totalorder %s90, %s93
    %p102 = scmp.eq.s32.totalorder %s17, 3
    %p103 = por %p101, %p102
    %p104 = scmp.ne.s32.totalorder %s93, %s94
    %p105 = scmp.eq.s32.totalorder %s17, 0
    %p106 = por %p104, %p105
    %p107 = scmp.ne.s32.totalorder %s93, %s94
    %p108 = scmp.eq.s32.totalorder %s18, 3
    %p109 = por %p107, %p108
    %p111 = scmp.ne.s32.totalorder %s94, %s110
    %p112 = scmp.eq.s32.totalorder %s18, 0
    %p113 = por %p111, %p112
    %s114 = ssub.s32 %s12, %s19
    %p115 = scmp.eq.s32.totalorder %s114, 0
    %s117 = sadd.s32 %s116, 1
    %s118 = scalar_select %p115, %s116, %s117
    %p121 = pneg %p115
    %p122 = scmp.eq.s32.totalorder %s12, 3
    %p123 = por %p121, %p122
    %p124 = scmp.ne.s32.totalorder %s116, %s119
    %p125 = scmp.eq.s32.totalorder %s12, 0
    %p126 = por %p124, %p125
    %p127 = scmp.ne.s32.totalorder %s116, %s119
    %p128 = scmp.eq.s32.totalorder %s17, 3
    %p129 = por %p127, %p128
    %p130 = scmp.ne.s32.totalorder %s119, %s120
    %p131 = scmp.eq.s32.totalorder %s17, 0
    %p132 = por %p130, %p131
    %p133 = scmp.ne.s32.totalorder %s119, %s120
    %p134 = scmp.eq.s32.totalorder %s18, 3
    %p135 = por %p133, %p134
    %p137 = scmp.ne.s32.totalorder %s120, %s136
    %p138 = scmp.eq.s32.totalorder %s18, 0
    %p139 = por %p137, %p138
    %s140 = ssub.s32 %s12, %s19
    %p141 = scmp.eq.s32.totalorder %s140, 0
    %s143 = sadd.s32 %s142, 1
    %s144 = scalar_select %p141, %s142, %s143
    %p147 = pneg %p141
    %p148 = scmp.eq.s32.totalorder %s12, 3
    %p149 = por %p147, %p148
    %p150 = scmp.ne.s32.totalorder %s142, %s145
    %p151 = scmp.eq.s32.totalorder %s12, 0
    %p152 = por %p150, %p151
    %p153 = scmp.ne.s32.totalorder %s142, %s145
    %p154 = scmp.eq.s32.totalorder %s17, 3
    %p155 = por %p153, %p154
    %p156 = scmp.ne.s32.totalorder %s145, %s146
    %p157 = scmp.eq.s32.totalorder %s17, 0
    %p158 = por %p156, %p157
    %p159 = scmp.ne.s32.totalorder %s145, %s146
    %p160 = scmp.eq.s32.totalorder %s18, 3
    %p161 = por %p159, %p160
    %p163 = scmp.ne.s32.totalorder %s146, %s162
    %p164 = scmp.eq.s32.totalorder %s18, 0
    %p165 = por %p163, %p164
    %p166 = scmp.le.s32.totalorder 1, %s12
    %p167 = scmp.lt.s32.totalorder %s12, 5
    %p168 = pnand %p166, %p167
    %p169 = pneg %p168
    // Predicated region
    $region9: #{_lambda_.2} parent=5 // pred_check
      _
    $region10: #{_lambda_.2} parent=5 // pred_check_branch
      %171 = sbr.rel (%p168) target = $region12
    $region11: #{_lambda_.2} parent=5 // pred_region
      %s172 = ssub.s32 %s12, 1
      // Predicated region
      $region13: #{_lambda_.2} parent=11 // pred_check
        %p173 = pneg %p59
      $region14: #{_lambda_.2} parent=11 // pred_check_branch
        %175 = sbr.rel (%p173) target = $region16
      $region15: #{_lambda_.2} parent=11 // pred_region
        _
      $region16: #{_lambda_.2} parent=11 // pred_fallthru
        _
      // Predicated region
      $region17: #{_lambda_.2} parent=11 // pred_check
        %p176 = pneg %p80
      $region18: #{_lambda_.2} parent=11 // pred_check_branch
        %178 = sbr.rel (%p176) target = $region20
      $region19: #{_lambda_.2} parent=11 // pred_region
        _
      $region20: #{_lambda_.2} parent=11 // pred_fallthru
        _
    $region12: #{_lambda_.2} parent=5 // pred_fallthru
      _
    %p179 = scmp.lt.s32.totalorder %s12, 4
    // Predicated region
    $region21: #{_lambda_.2} parent=5 // pred_check
      %p180 = pneg %p179
    $region22: #{_lambda_.2} parent=5 // pred_check_branch
      %182 = sbr.rel (%p180) target = $region24
    $region23: #{_lambda_.2} parent=5 // pred_region
      // Predicated region
      $region25: #{_lambda_.2} parent=23 // pred_check
        %p183 = pneg %p32
      $region26: #{_lambda_.2} parent=23 // pred_check_branch
        %185 = sbr.rel (%p183) target = $region28
      $region27: #{_lambda_.2} parent=23 // pred_region
        %s186 = smul.u32 4, %s12
        %p187 = scmp.lt.s32.totalorder %s186, 15
        %s188 = scalar_select %p187, %s186, 15
        %s189 = smul.addr %s188, 5
        %s190 = smul.addr %s189, 8
        %s191 = scalar_lea.vmem %s0, %s190
        %s192 = smul.u32 4, %s12
      $region28: #{_lambda_.2} parent=23 // pred_fallthru
        _
    $region24: #{_lambda_.2} parent=5 // pred_fallthru
      _
    %p193 = scmp.le.s32.totalorder 1, %s12
    %p194 = scmp.lt.s32.totalorder %s12, 5
    %p195 = pnand %p193, %p194
    %p196 = pneg %p195
    // Predicated region
    $region29: #{_lambda_.2} parent=5 // pred_check
      _
    $region30: #{_lambda_.2} parent=5 // pred_check_branch
      %198 = sbr.rel (%p195) target = $region32
    $region31: #{_lambda_.2} parent=5 // pred_region
      %s199 = ssub.s32 %s12, 1
      %s200 = smul.u32 4, %s17
      %p201 = scmp.lt.s32.totalorder %s200, 15
      %s202 = scalar_select %p201, %s200, 15
      %s203 = smul.addr %s202, 5
      %s204 = smul.addr %s203, 8
      %s205 = scalar_lea.vmem %s0, %s204
      %p206 = pneg %p38
      %p207 = pneg %p35
      %p208 = pneg %p59
      %p209 = pneg %p56
      %p210 = pneg %p80
      %p211 = pneg %p77
      %p212 = pneg %p106
      %p213 = pneg %p103
      %s214 = smul.u32 4, %s17
      %p215 = scmp.lt.s32.totalorder %s214, 15
      %s216 = scalar_select %p215, %s214, 15
      %s217 = smul.addr %s216, 5
      %s218 = smul.addr %s217, 8
      %s219 = scalar_lea.vmem %s3, %s218
      %p220 = pneg %p132
      %p221 = pneg %p129
      %p222 = scmp.lt.s32.totalorder %s17, 3
      %s223 = scalar_select %p222, %s17, 3
      %s224 = smul.addr %s223, 5
      %s225 = scalar_lea.vmem %s4, %s224
      %p226 = pneg %p158
      %p227 = pneg %p155
      %p228 = scmp.lt.s32.totalorder %s17, 3
      %s229 = scalar_select %p228, %s17, 3
      %s230 = smul.addr %s229, 5
      %s231 = scalar_lea.vmem %s5, %s230
      %s232 = smul.u32 4, %s17
      %p233 = scmp.lt.s32.totalorder %s232, 15
      %s234 = scalar_select %p233, %s232, 15
      %s235 = smul.addr %s234, 5
      %s236 = smul.addr %s235, 8
      %s237 = scalar_lea.vmem %s0, %s236
      %s238 = smul.u32 4, %s17
      %s239 = smul.u32 4, %s17
      %p240 = scmp.lt.s32.totalorder %s239, 15
      %s241 = scalar_select %p240, %s239, 15
      %s242 = smul.addr %s241, 5
      %s243 = smul.addr %s242, 8
      %s244 = scalar_lea.vmem %s3, %s243
      %s245 = smul.u32 4, %s17
      %p246 = scmp.lt.s32.totalorder %s17, 3
      %s247 = scalar_select %p246, %s17, 3
      %s248 = smul.addr %s247, 5
      %s249 = scalar_lea.vmem %s4, %s248
      %p250 = scmp.lt.s32.totalorder %s17, 3
      %s251 = scalar_select %p250, %s17, 3
      %s252 = smul.addr %s251, 5
      %s253 = scalar_lea.vmem %s5, %s252
      %v254 = vld [vmem:[%s237] sm:$0xff]
      %v255 = vld [vmem:[%s237 + $0x8] sm:$0xff]
      %v256 = vld [vmem:[%s237 + $0x10] sm:$0xff]
      %v257 = vld [vmem:[%s237 + $0x18] sm:$0xff]
      %v258 = vld [vmem:[%s237 + $0x20] sm:$0xff]
      %v259 = vld [vmem:[%s237 + $0x28] sm:$0xff]
      %v260 = vld [vmem:[%s237 + $0x30] sm:$0xff]
      %v261 = vld [vmem:[%s237 + $0x38] sm:$0xff]
      %v262 = vld [vmem:[%s237 + $0x40] sm:$0xff]
      %v263 = vld [vmem:[%s237 + $0x48] sm:$0xff]
      %v264 = vld [vmem:[%s237 + $0x50] sm:$0xff]
      %v265 = vld [vmem:[%s237 + $0x58] sm:$0xff]
      %v266 = vld [vmem:[%s237 + $0x60] sm:$0xff]
      %v267 = vld [vmem:[%s237 + $0x68] sm:$0xff]
      %v268 = vld [vmem:[%s237 + $0x70] sm:$0xff]
      %v269 = vld [vmem:[%s237 + $0x78] sm:$0xff]
      %v270 = vld [vmem:[%s237 + $0x80] sm:$0xff]
      %v271 = vld [vmem:[%s237 + $0x88] sm:$0xff]
      %v272 = vld [vmem:[%s237 + $0x90] sm:$0xff]
      %v273 = vld [vmem:[%s237 + $0x98] sm:$0xff]
      %v274 = vld [vmem:[%s1] sm:$0xff]
      %v275 = vld [vmem:[%s1 + $0x8] sm:$0xff]
      %v276 = vld [vmem:[%s1 + $0x10] sm:$0xff]
      %v277 = vld [vmem:[%s1 + $0x18] sm:$0xff]
      %v278 = vld [vmem:[%s1 + $0x20] sm:$0xff]
      %v279 = vld [vmem:[%s1 + $0x28] sm:$0xff]
      %v280 = vld [vmem:[%s1 + $0x30] sm:$0xff]
      %v281 = vld [vmem:[%s1 + $0x38] sm:$0xff]
      %v282 = vld [vmem:[%s1 + $0x40] sm:$0xff]
      %v283 = vld [vmem:[%s1 + $0x48] sm:$0xff]
      %v284 = vld [vmem:[%s1 + $0x50] sm:$0xff]
      %v285 = vld [vmem:[%s1 + $0x58] sm:$0xff]
      %v286 = vld [vmem:[%s1 + $0x60] sm:$0xff]
      %v287 = vld [vmem:[%s1 + $0x68] sm:$0xff]
      %v288 = vld [vmem:[%s1 + $0x70] sm:$0xff]
      %v289 = vld [vmem:[%s1 + $0x78] sm:$0xff]
      %v290 = vld [vmem:[%s1 + $0x80] sm:$0xff]
      %v291 = vld [vmem:[%s1 + $0x88] sm:$0xff]
      %v292 = vld [vmem:[%s1 + $0x90] sm:$0xff]
      %v293 = vld [vmem:[%s1 + $0x98] sm:$0xff]
      %v294 = vld [vmem:[%s1 + $0xa0] sm:$0xff]
      %v295 = vld [vmem:[%s1 + $0xa8] sm:$0xff]
      %v296 = vld [vmem:[%s1 + $0xb0] sm:$0xff]
      %v297 = vld [vmem:[%s1 + $0xb8] sm:$0xff]
      %v298 = vld [vmem:[%s1 + $0xc0] sm:$0xff]
      %v299 = vld [vmem:[%s1 + $0xc8] sm:$0xff]
      %v300 = vld [vmem:[%s1 + $0xd0] sm:$0xff]
      %v301 = vld [vmem:[%s1 + $0xd8] sm:$0xff]
      %v302 = vld [vmem:[%s1 + $0xe0] sm:$0xff]
      %v303 = vld [vmem:[%s1 + $0xe8] sm:$0xff]
      %v304 = vld [vmem:[%s1 + $0xf0] sm:$0xff]
      %v305 = vld [vmem:[%s1 + $0xf8] sm:$0xff]
      %v306 = vld [vmem:[%s1 + $0x100] sm:$0xff]
      %v307 = vld [vmem:[%s1 + $0x108] sm:$0xff]
      %v308 = vld [vmem:[%s1 + $0x110] sm:$0xff]
      %v309 = vld [vmem:[%s1 + $0x118] sm:$0xff]
      %v310 = vld [vmem:[%s1 + $0x120] sm:$0xff]
      %v311 = vld [vmem:[%s1 + $0x128] sm:$0xff]
      %v312 = vld [vmem:[%s1 + $0x130] sm:$0xff]
      %v313 = vld [vmem:[%s1 + $0x138] sm:$0xff]
      %v314 = vld [vmem:[%s1 + $0x140] sm:$0xff]
      %v315 = vld [vmem:[%s1 + $0x148] sm:$0xff]
      %v316 = vld [vmem:[%s1 + $0x150] sm:$0xff]
      %v317 = vld [vmem:[%s1 + $0x158] sm:$0xff]
      %v318 = vld [vmem:[%s1 + $0x160] sm:$0xff]
      %v319 = vld [vmem:[%s1 + $0x168] sm:$0xff]
      %v320 = vld [vmem:[%s1 + $0x170] sm:$0xff]
      %v321 = vld [vmem:[%s1 + $0x178] sm:$0xff]
      %v322 = vld [vmem:[%s1 + $0x180] sm:$0xff]
      %v323 = vld [vmem:[%s1 + $0x188] sm:$0xff]
      %v324 = vld [vmem:[%s1 + $0x190] sm:$0xff]
      %v325 = vld [vmem:[%s1 + $0x198] sm:$0xff]
      %v326 = vld [vmem:[%s1 + $0x1a0] sm:$0xff]
      %v327 = vld [vmem:[%s1 + $0x1a8] sm:$0xff]
      %v328 = vld [vmem:[%s1 + $0x1b0] sm:$0xff]
      %v329 = vld [vmem:[%s1 + $0x1b8] sm:$0xff]
      %v330 = vld [vmem:[%s1 + $0x1c0] sm:$0xff]
      %v331 = vld [vmem:[%s1 + $0x1c8] sm:$0xff]
      %v332 = vld [vmem:[%s1 + $0x1d0] sm:$0xff]
      %v333 = vld [vmem:[%s1 + $0x1d8] sm:$0xff]
      %v334 = vld [vmem:[%s1 + $0x1e0] sm:$0xff]
      %v335 = vld [vmem:[%s1 + $0x1e8] sm:$0xff]
      %v336 = vld [vmem:[%s1 + $0x1f0] sm:$0xff]
      %v337 = vld [vmem:[%s1 + $0x1f8] sm:$0xff]
      %v338 = vld [vmem:[%s1 + $0x200] sm:$0xff]
      %v339 = vld [vmem:[%s1 + $0x208] sm:$0xff]
      %v340 = vld [vmem:[%s1 + $0x210] sm:$0xff]
      %v341 = vld [vmem:[%s1 + $0x218] sm:$0xff]
      %v342 = vld [vmem:[%s1 + $0x220] sm:$0xff]
      %v343 = vld [vmem:[%s1 + $0x228] sm:$0xff]
      %v344 = vld [vmem:[%s1 + $0x230] sm:$0xff]
      %v345 = vld [vmem:[%s1 + $0x238] sm:$0xff]
      %v346 = vld [vmem:[%s1 + $0x240] sm:$0xff]
      %v347 = vld [vmem:[%s1 + $0x248] sm:$0xff]
      %v348 = vld [vmem:[%s1 + $0x250] sm:$0xff]
      %v349 = vld [vmem:[%s1 + $0x258] sm:$0xff]
      %v350 = vld [vmem:[%s1 + $0x260] sm:$0xff]
      %v351 = vld [vmem:[%s1 + $0x268] sm:$0xff]
      %v352 = vld [vmem:[%s1 + $0x270] sm:$0xff]
      %v353 = vld [vmem:[%s1 + $0x278] sm:$0xff]
      %v354 = vld [vmem:[%s1 + $0x280] sm:$0xff]
      %v355 = vld [vmem:[%s1 + $0x288] sm:$0xff]
      %v356 = vld [vmem:[%s1 + $0x290] sm:$0xff]
      %v357 = vld [vmem:[%s1 + $0x298] sm:$0xff]
      %v358 = vld [vmem:[%s1 + $0x2a0] sm:$0xff]
      %v359 = vld [vmem:[%s1 + $0x2a8] sm:$0xff]
      %v360 = vld [vmem:[%s1 + $0x2b0] sm:$0xff]
      %v361 = vld [vmem:[%s1 + $0x2b8] sm:$0xff]
      %v362 = vld [vmem:[%s1 + $0x2c0] sm:$0xff]
      %v363 = vld [vmem:[%s1 + $0x2c8] sm:$0xff]
      %v364 = vld [vmem:[%s1 + $0x2d0] sm:$0xff]
      %v365 = vld [vmem:[%s1 + $0x2d8] sm:$0xff]
      %v366 = vld [vmem:[%s1 + $0x2e0] sm:$0xff]
      %v367 = vld [vmem:[%s1 + $0x2e8] sm:$0xff]
      %v368 = vld [vmem:[%s1 + $0x2f0] sm:$0xff]
      %v369 = vld [vmem:[%s1 + $0x2f8] sm:$0xff]
      %v370 = vld [vmem:[%s1 + $0x300] sm:$0xff]
      %v371 = vld [vmem:[%s1 + $0x308] sm:$0xff]
      %v372 = vld [vmem:[%s1 + $0x310] sm:$0xff]
      %v373 = vld [vmem:[%s1 + $0x318] sm:$0xff]
      %v374 = vld [vmem:[%s1 + $0x320] sm:$0xff]
      %v375 = vld [vmem:[%s1 + $0x328] sm:$0xff]
      %v376 = vld [vmem:[%s1 + $0x330] sm:$0xff]
      %v377 = vld [vmem:[%s1 + $0x338] sm:$0xff]
      %v378 = vld [vmem:[%s1 + $0x340] sm:$0xff]
      %v379 = vld [vmem:[%s1 + $0x348] sm:$0xff]
      %v380 = vld [vmem:[%s1 + $0x350] sm:$0xff]
      %v381 = vld [vmem:[%s1 + $0x358] sm:$0xff]
      %v382 = vld [vmem:[%s1 + $0x360] sm:$0xff]
      %v383 = vld [vmem:[%s1 + $0x368] sm:$0xff]
      %v384 = vld [vmem:[%s1 + $0x370] sm:$0xff]
      %v385 = vld [vmem:[%s1 + $0x378] sm:$0xff]
      %v386 = vld [vmem:[%s1 + $0x380] sm:$0xff]
      %v387 = vld [vmem:[%s1 + $0x388] sm:$0xff]
      %v388 = vld [vmem:[%s1 + $0x390] sm:$0xff]
      %v389 = vld [vmem:[%s1 + $0x398] sm:$0xff]
      %v390 = vld [vmem:[%s1 + $0x3a0] sm:$0xff]
      %v391 = vld [vmem:[%s1 + $0x3a8] sm:$0xff]
      %v392 = vld [vmem:[%s1 + $0x3b0] sm:$0xff]
      %v393 = vld [vmem:[%s1 + $0x3b8] sm:$0xff]
      %v394 = vld [vmem:[%s1 + $0x3c0] sm:$0xff]
      %v395 = vld [vmem:[%s1 + $0x3c8] sm:$0xff]
      %v396 = vld [vmem:[%s1 + $0x3d0] sm:$0xff]
      %v397 = vld [vmem:[%s1 + $0x3d8] sm:$0xff]
      %v398 = vld [vmem:[%s1 + $0x3e0] sm:$0xff]
      %v399 = vld [vmem:[%s1 + $0x3e8] sm:$0xff]
      %v400 = vld [vmem:[%s1 + $0x3f0] sm:$0xff]
      %v401 = vld [vmem:[%s1 + $0x3f8] sm:$0xff]
      %v402 = vld [vmem:[%s1 + $0x400] sm:$0xff]
      %v403 = vld [vmem:[%s1 + $0x408] sm:$0xff]
      %v404 = vld [vmem:[%s1 + $0x410] sm:$0xff]
      %v405 = vld [vmem:[%s1 + $0x418] sm:$0xff]
      %v406 = vld [vmem:[%s1 + $0x420] sm:$0xff]
      %v407 = vld [vmem:[%s1 + $0x428] sm:$0xff]
      %v408 = vld [vmem:[%s1 + $0x430] sm:$0xff]
      %v409 = vld [vmem:[%s1 + $0x438] sm:$0xff]
      %v410 = vld [vmem:[%s1 + $0x440] sm:$0xff]
      %v411 = vld [vmem:[%s1 + $0x448] sm:$0xff]
      %v412 = vld [vmem:[%s1 + $0x450] sm:$0xff]
      %v413 = vld [vmem:[%s1 + $0x458] sm:$0xff]
      %v414 = vld [vmem:[%s1 + $0x460] sm:$0xff]
      %v415 = vld [vmem:[%s1 + $0x468] sm:$0xff]
      %v416 = vld [vmem:[%s1 + $0x470] sm:$0xff]
      %v417 = vld [vmem:[%s1 + $0x478] sm:$0xff]
      %v418 = vld [vmem:[%s1 + $0x480] sm:$0xff]
      %v419 = vld [vmem:[%s1 + $0x488] sm:$0xff]
      %v420 = vld [vmem:[%s1 + $0x490] sm:$0xff]
      %v421 = vld [vmem:[%s1 + $0x498] sm:$0xff]
      %v422 = vld [vmem:[%s1 + $0x4a0] sm:$0xff]
      %v423 = vld [vmem:[%s1 + $0x4a8] sm:$0xff]
      %v424 = vld [vmem:[%s1 + $0x4b0] sm:$0xff]
      %v425 = vld [vmem:[%s1 + $0x4b8] sm:$0xff]
      %v426 = vld [vmem:[%s1 + $0x4c0] sm:$0xff]
      %v427 = vld [vmem:[%s1 + $0x4c8] sm:$0xff]
      %v428 = vld [vmem:[%s1 + $0x4d0] sm:$0xff]
      %v429 = vld [vmem:[%s1 + $0x4d8] sm:$0xff]
      %v430 = vld [vmem:[%s1 + $0x4e0] sm:$0xff]
      %v431 = vld [vmem:[%s1 + $0x4e8] sm:$0xff]
      %v432 = vld [vmem:[%s1 + $0x4f0] sm:$0xff]
      %v433 = vld [vmem:[%s1 + $0x4f8] sm:$0xff]
      %v434 = vld [vmem:[%s1 + $0x500] sm:$0xff]
      %v435 = vld [vmem:[%s1 + $0x508] sm:$0xff]
      %v436 = vld [vmem:[%s1 + $0x510] sm:$0xff]
      %v437 = vld [vmem:[%s1 + $0x518] sm:$0xff]
      %v438 = vld [vmem:[%s1 + $0x520] sm:$0xff]
      %v439 = vld [vmem:[%s1 + $0x528] sm:$0xff]
      %v440 = vld [vmem:[%s1 + $0x530] sm:$0xff]
      %v441 = vld [vmem:[%s1 + $0x538] sm:$0xff]
      %v442 = vld [vmem:[%s1 + $0x540] sm:$0xff]
      %v443 = vld [vmem:[%s1 + $0x548] sm:$0xff]
      %v444 = vld [vmem:[%s1 + $0x550] sm:$0xff]
      %v445 = vld [vmem:[%s1 + $0x558] sm:$0xff]
      %v446 = vld [vmem:[%s1 + $0x560] sm:$0xff]
      %v447 = vld [vmem:[%s1 + $0x568] sm:$0xff]
      %v448 = vld [vmem:[%s1 + $0x570] sm:$0xff]
      %v449 = vld [vmem:[%s1 + $0x578] sm:$0xff]
      %v450 = vld [vmem:[%s1 + $0x580] sm:$0xff]
      %v451 = vld [vmem:[%s1 + $0x588] sm:$0xff]
      %v452 = vld [vmem:[%s1 + $0x590] sm:$0xff]
      %v453 = vld [vmem:[%s1 + $0x598] sm:$0xff]
      %v454 = vld [vmem:[%s1 + $0x5a0] sm:$0xff]
      %v455 = vld [vmem:[%s1 + $0x5a8] sm:$0xff]
      %v456 = vld [vmem:[%s1 + $0x5b0] sm:$0xff]
      %v457 = vld [vmem:[%s1 + $0x5b8] sm:$0xff]
      %v458 = vld [vmem:[%s1 + $0x5c0] sm:$0xff]
      %v459 = vld [vmem:[%s1 + $0x5c8] sm:$0xff]
      %v460 = vld [vmem:[%s1 + $0x5d0] sm:$0xff]
      %v461 = vld [vmem:[%s1 + $0x5d8] sm:$0xff]
      %v462 = vld [vmem:[%s1 + $0x5e0] sm:$0xff]
      %v463 = vld [vmem:[%s1 + $0x5e8] sm:$0xff]
      %v464 = vld [vmem:[%s1 + $0x5f0] sm:$0xff]
      %v465 = vld [vmem:[%s1 + $0x5f8] sm:$0xff]
      %v466 = vld [vmem:[%s1 + $0x600] sm:$0xff]
      %v467 = vld [vmem:[%s1 + $0x608] sm:$0xff]
      %v468 = vld [vmem:[%s1 + $0x610] sm:$0xff]
      %v469 = vld [vmem:[%s1 + $0x618] sm:$0xff]
      %v470 = vld [vmem:[%s1 + $0x620] sm:$0xff]
      %v471 = vld [vmem:[%s1 + $0x628] sm:$0xff]
      %v472 = vld [vmem:[%s1 + $0x630] sm:$0xff]
      %v473 = vld [vmem:[%s1 + $0x638] sm:$0xff]
      %v474 = vld [vmem:[%s1 + $0x640] sm:$0xff]
      %v475 = vld [vmem:[%s1 + $0x648] sm:$0xff]
      %v476 = vld [vmem:[%s1 + $0x650] sm:$0xff]
      %v477 = vld [vmem:[%s1 + $0x658] sm:$0xff]
      %v478 = vld [vmem:[%s1 + $0x660] sm:$0xff]
      %v479 = vld [vmem:[%s1 + $0x668] sm:$0xff]
      %v480 = vld [vmem:[%s1 + $0x670] sm:$0xff]
      %v481 = vld [vmem:[%s1 + $0x678] sm:$0xff]
      %v482 = vld [vmem:[%s1 + $0x680] sm:$0xff]
      %v483 = vld [vmem:[%s1 + $0x688] sm:$0xff]
      %v484 = vld [vmem:[%s1 + $0x690] sm:$0xff]
      %v485 = vld [vmem:[%s1 + $0x698] sm:$0xff]
      %v486 = vld [vmem:[%s1 + $0x6a0] sm:$0xff]
      %v487 = vld [vmem:[%s1 + $0x6a8] sm:$0xff]
      %v488 = vld [vmem:[%s1 + $0x6b0] sm:$0xff]
      %v489 = vld [vmem:[%s1 + $0x6b8] sm:$0xff]
      %v490 = vld [vmem:[%s1 + $0x6c0] sm:$0xff]
      %v491 = vld [vmem:[%s1 + $0x6c8] sm:$0xff]
      %v492 = vld [vmem:[%s1 + $0x6d0] sm:$0xff]
      %v493 = vld [vmem:[%s1 + $0x6d8] sm:$0xff]
      %v494 = vld [vmem:[%s1 + $0x6e0] sm:$0xff]
      %v495 = vld [vmem:[%s1 + $0x6e8] sm:$0xff]
      %v496 = vld [vmem:[%s1 + $0x6f0] sm:$0xff]
      %v497 = vld [vmem:[%s1 + $0x6f8] sm:$0xff]
      %v498 = vld [vmem:[%s1 + $0x700] sm:$0xff]
      %v499 = vld [vmem:[%s1 + $0x708] sm:$0xff]
      %v500 = vld [vmem:[%s1 + $0x710] sm:$0xff]
      %v501 = vld [vmem:[%s1 + $0x718] sm:$0xff]
      %v502 = vld [vmem:[%s1 + $0x720] sm:$0xff]
      %v503 = vld [vmem:[%s1 + $0x728] sm:$0xff]
      %v504 = vld [vmem:[%s1 + $0x730] sm:$0xff]
      %v505 = vld [vmem:[%s1 + $0x738] sm:$0xff]
      %v506 = vld [vmem:[%s1 + $0x740] sm:$0xff]
      %v507 = vld [vmem:[%s1 + $0x748] sm:$0xff]
      %v508 = vld [vmem:[%s1 + $0x750] sm:$0xff]
      %v509 = vld [vmem:[%s1 + $0x758] sm:$0xff]
      %v510 = vld [vmem:[%s1 + $0x760] sm:$0xff]
      %v511 = vld [vmem:[%s1 + $0x768] sm:$0xff]
      %v512 = vld [vmem:[%s1 + $0x770] sm:$0xff]
      %v513 = vld [vmem:[%s1 + $0x778] sm:$0xff]
      %v514 = vld [vmem:[%s1 + $0x780] sm:$0xff]
      %v515 = vld [vmem:[%s1 + $0x788] sm:$0xff]
      %v516 = vld [vmem:[%s1 + $0x790] sm:$0xff]
      %v517 = vld [vmem:[%s1 + $0x798] sm:$0xff]
      %v518 = vld [vmem:[%s1 + $0x7a0] sm:$0xff]
      %v519 = vld [vmem:[%s1 + $0x7a8] sm:$0xff]
      %v520 = vld [vmem:[%s1 + $0x7b0] sm:$0xff]
      %v521 = vld [vmem:[%s1 + $0x7b8] sm:$0xff]
      %v522 = vld [vmem:[%s1 + $0x7c0] sm:$0xff]
      %v523 = vld [vmem:[%s1 + $0x7c8] sm:$0xff]
      %v524 = vld [vmem:[%s1 + $0x7d0] sm:$0xff]
      %v525 = vld [vmem:[%s1 + $0x7d8] sm:$0xff]
      %v526 = vld [vmem:[%s1 + $0x7e0] sm:$0xff]
      %v527 = vld [vmem:[%s1 + $0x7e8] sm:$0xff]
      %v528 = vld [vmem:[%s1 + $0x7f0] sm:$0xff]
      %v529 = vld [vmem:[%s1 + $0x7f8] sm:$0xff]
      %v530 = vld [vmem:[%s1 + $0x800] sm:$0xff]
      %v531 = vld [vmem:[%s1 + $0x808] sm:$0xff]
      %v532 = vld [vmem:[%s1 + $0x810] sm:$0xff]
      %v533 = vld [vmem:[%s1 + $0x818] sm:$0xff]
      %v534 = vld [vmem:[%s1 + $0x820] sm:$0xff]
      %v535 = vld [vmem:[%s1 + $0x828] sm:$0xff]
      %v536 = vld [vmem:[%s1 + $0x830] sm:$0xff]
      %v537 = vld [vmem:[%s1 + $0x838] sm:$0xff]
      %v538 = vld [vmem:[%s1 + $0x840] sm:$0xff]
      %v539 = vld [vmem:[%s1 + $0x848] sm:$0xff]
      %v540 = vld [vmem:[%s1 + $0x850] sm:$0xff]
      %v541 = vld [vmem:[%s1 + $0x858] sm:$0xff]
      %v542 = vld [vmem:[%s1 + $0x860] sm:$0xff]
      %v543 = vld [vmem:[%s1 + $0x868] sm:$0xff]
      %v544 = vld [vmem:[%s1 + $0x870] sm:$0xff]
      %v545 = vld [vmem:[%s1 + $0x878] sm:$0xff]
      %v546 = vld [vmem:[%s1 + $0x880] sm:$0xff]
      %v547 = vld [vmem:[%s1 + $0x888] sm:$0xff]
      %v548 = vld [vmem:[%s1 + $0x890] sm:$0xff]
      %v549 = vld [vmem:[%s1 + $0x898] sm:$0xff]
      %v550 = vld [vmem:[%s1 + $0x8a0] sm:$0xff]
      %v551 = vld [vmem:[%s1 + $0x8a8] sm:$0xff]
      %v552 = vld [vmem:[%s1 + $0x8b0] sm:$0xff]
      %v553 = vld [vmem:[%s1 + $0x8b8] sm:$0xff]
      %v554 = vld [vmem:[%s1 + $0x8c0] sm:$0xff]
      %v555 = vld [vmem:[%s1 + $0x8c8] sm:$0xff]
      %v556 = vld [vmem:[%s1 + $0x8d0] sm:$0xff]
      %v557 = vld [vmem:[%s1 + $0x8d8] sm:$0xff]
      %v558 = vld [vmem:[%s1 + $0x8e0] sm:$0xff]
      %v559 = vld [vmem:[%s1 + $0x8e8] sm:$0xff]
      %v560 = vld [vmem:[%s1 + $0x8f0] sm:$0xff]
      %v561 = vld [vmem:[%s1 + $0x8f8] sm:$0xff]
      %v562 = vld [vmem:[%s1 + $0x900] sm:$0xff]
      %v563 = vld [vmem:[%s1 + $0x908] sm:$0xff]
      %v564 = vld [vmem:[%s1 + $0x910] sm:$0xff]
      %v565 = vld [vmem:[%s1 + $0x918] sm:$0xff]
      %v566 = vld [vmem:[%s1 + $0x920] sm:$0xff]
      %v567 = vld [vmem:[%s1 + $0x928] sm:$0xff]
      %v568 = vld [vmem:[%s1 + $0x930] sm:$0xff]
      %v569 = vld [vmem:[%s1 + $0x938] sm:$0xff]
      %v570 = vld [vmem:[%s1 + $0x940] sm:$0xff]
      %v571 = vld [vmem:[%s1 + $0x948] sm:$0xff]
      %v572 = vld [vmem:[%s1 + $0x950] sm:$0xff]
      %v573 = vld [vmem:[%s1 + $0x958] sm:$0xff]
      %v574 = vld [vmem:[%s1 + $0x960] sm:$0xff]
      %v575 = vld [vmem:[%s1 + $0x968] sm:$0xff]
      %v576 = vld [vmem:[%s1 + $0x970] sm:$0xff]
      %v577 = vld [vmem:[%s1 + $0x978] sm:$0xff]
      %v578 = vld [vmem:[%s1 + $0x980] sm:$0xff]
      %v579 = vld [vmem:[%s1 + $0x988] sm:$0xff]
      %v580 = vld [vmem:[%s1 + $0x990] sm:$0xff]
      %v581 = vld [vmem:[%s1 + $0x998] sm:$0xff]
      %v582 = vld [vmem:[%s1 + $0x9a0] sm:$0xff]
      %v583 = vld [vmem:[%s1 + $0x9a8] sm:$0xff]
      %v584 = vld [vmem:[%s1 + $0x9b0] sm:$0xff]
      %v585 = vld [vmem:[%s1 + $0x9b8] sm:$0xff]
      %v586 = vld [vmem:[%s1 + $0x9c0] sm:$0xff]
      %v587 = vld [vmem:[%s1 + $0x9c8] sm:$0xff]
      %v588 = vld [vmem:[%s1 + $0x9d0] sm:$0xff]
      %v589 = vld [vmem:[%s1 + $0x9d8] sm:$0xff]
      %v590 = vld [vmem:[%s1 + $0x9e0] sm:$0xff]
      %v591 = vld [vmem:[%s1 + $0x9e8] sm:$0xff]
      %v592 = vld [vmem:[%s1 + $0x9f0] sm:$0xff]
      %v593 = vld [vmem:[%s1 + $0x9f8] sm:$0xff]
      %v594 = vld [vmem:[%s1 + $0xa00] sm:$0xff]
      %v595 = vld [vmem:[%s1 + $0xa08] sm:$0xff]
      %v596 = vld [vmem:[%s1 + $0xa10] sm:$0xff]
      %v597 = vld [vmem:[%s1 + $0xa18] sm:$0xff]
      %v598 = vld [vmem:[%s1 + $0xa20] sm:$0xff]
      %v599 = vld [vmem:[%s1 + $0xa28] sm:$0xff]
      %v600 = vld [vmem:[%s1 + $0xa30] sm:$0xff]
      %v601 = vld [vmem:[%s1 + $0xa38] sm:$0xff]
      %v602 = vld [vmem:[%s1 + $0xa40] sm:$0xff]
      %v603 = vld [vmem:[%s1 + $0xa48] sm:$0xff]
      %v604 = vld [vmem:[%s1 + $0xa50] sm:$0xff]
      %v605 = vld [vmem:[%s1 + $0xa58] sm:$0xff]
      %v606 = vld [vmem:[%s1 + $0xa60] sm:$0xff]
      %v607 = vld [vmem:[%s1 + $0xa68] sm:$0xff]
      %v608 = vld [vmem:[%s1 + $0xa70] sm:$0xff]
      %v609 = vld [vmem:[%s1 + $0xa78] sm:$0xff]
      %v610 = vld [vmem:[%s1 + $0xa80] sm:$0xff]
      %v611 = vld [vmem:[%s1 + $0xa88] sm:$0xff]
      %v612 = vld [vmem:[%s1 + $0xa90] sm:$0xff]
      %v613 = vld [vmem:[%s1 + $0xa98] sm:$0xff]
      %v614 = vld [vmem:[%s2] sm:$0x1f]
      %v616 = vlaneseq
      %v617 = vshrl.u32 %v616, 7
      %v618 = vsub.s32 0, %v617
      %v619 = vrot.slane %v614, %v618
      %v620 = vlaneseq
      %v621 = vshrl.u32 %v620, 7
      %v622 = vsub.s32 1, %v621
      %v623 = vrot.slane %v614, %v622
      %v624 = vlaneseq
      %v625 = vshrl.u32 %v624, 7
      %v626 = vsub.s32 2, %v625
      %v627 = vrot.slane %v614, %v626
      %v628 = vlaneseq
      %v629 = vshrl.u32 %v628, 7
      %v630 = vsub.s32 3, %v629
      %v631 = vrot.slane %v614, %v630
      %v632 = vlaneseq
      %v633 = vshrl.u32 %v632, 7
      %v634 = vsub.s32 4, %v633
      %v635 = vrot.slane %v614, %v634
      %vm641 = vcmask 261120
      %v643 = vsel %vm641, %v258, 0
      %v646 = vsel %vm641, %v263, 0
      %v649 = vsel %vm641, %v268, 0
      %v652 = vsel %vm641, %v273, 0
      %654 = vmatprep.subr.mxu0 %v350
      %655 = vmatpush1.msra.mxu0 %v349
      %656 = vmatprep.subr.mxu0 %v345
      %657 = vmatpush1.msra.mxu0 %v344
      %658 = vmatprep.subr.mxu0 %v340
      %659 = vmatpush1.msra.mxu0 %v339
      %660 = vmatprep.subr.mxu0 %v335
      %661 = vmatpush1.msra.mxu0 %v334
      %662 = vmatprep.subr.mxu0 %v330
      %663 = vmatpush1.msra.mxu0 %v329
      %664 = vmatprep.subr.mxu0 %v325
      %665 = vmatpush1.msra.mxu0 %v324
      %666 = vmatprep.subr.mxu0 %v320
      %667 = vmatpush1.msra.mxu0 %v319
      %668 = vmatprep.subr.mxu0 %v315
      %669 = vmatpush1.msra.mxu0 %v314
      %670 = vmatprep.subr.mxu0 %v310
      %671 = vmatpush1.msra.mxu0 %v309
      %672 = vmatprep.subr.mxu0 %v305
      %673 = vmatpush1.msra.mxu0 %v304
      %674 = vmatprep.subr.mxu0 %v300
      %675 = vmatpush1.msra.mxu0 %v299
      %676 = vmatprep.subr.mxu0 %v295
      %677 = vmatpush1.msra.mxu0 %v294
      %678 = vmatprep.subr.mxu0 %v290
      %679 = vmatpush1.msra.mxu0 %v289
      %680 = vmatprep.subr.mxu0 %v285
      %681 = vmatpush1.msra.mxu0 %v284
      %682 = vmatprep.subr.mxu0 %v280
      %683 = vmatpush1.msra.mxu0 %v279
      %684 = vmatprep.subr.mxu0 %v275
      %685 = vmatpush1.msra.mxu0 %v274
      %686 = vmatprep.subr.mxu0 %v430
      %687 = vmatpush2.msra.mxu0 %v429
      %688 = vmatprep.subr.mxu0 %v425
      %689 = vmatpush2.msra.mxu0 %v424
      %690 = vmatprep.subr.mxu0 %v420
      %691 = vmatpush2.msra.mxu0 %v419
      %692 = vmatprep.subr.mxu0 %v415
      %693 = vmatpush2.msra.mxu0 %v414
      %694 = vmatprep.subr.mxu0 %v410
      %695 = vmatpush2.msra.mxu0 %v409
      %696 = vmatprep.subr.mxu0 %v405
      %697 = vmatpush2.msra.mxu0 %v404
      %698 = vmatprep.subr.mxu0 %v400
      %699 = vmatpush2.msra.mxu0 %v399
      %700 = vmatprep.subr.mxu0 %v395
      %701 = vmatpush2.msra.mxu0 %v394
      %702 = vmatprep.subr.mxu0 %v390
      %703 = vmatpush2.msra.mxu0 %v389
      %704 = vmatprep.subr.mxu0 %v385
      %705 = vmatpush2.msra.mxu0 %v384
      %706 = vmatprep.subr.mxu0 %v380
      %707 = vmatpush2.msra.mxu0 %v379
      %708 = vmatprep.subr.mxu0 %v375
      %709 = vmatpush2.msra.mxu0 %v374
      %710 = vmatprep.subr.mxu0 %v370
      %711 = vmatpush2.msra.mxu0 %v369
      %712 = vmatprep.subr.mxu0 %v365
      %713 = vmatpush2.msra.mxu0 %v364
      %714 = vmatprep.subr.mxu0 %v360
      %715 = vmatpush2.msra.mxu0 %v359
      %716 = vmatprep.subr.mxu0 %v355
      %717 = vmatpush2.msra.mxu0 %v354
      %718 = vmatprep.mubr.f32.mxu0 %v255
      %719 = vmatmul.mubr.f32.gmra.mxu0 %v254
      %v720 = vpop.f32.mrf.mxu0
      %v721 = vadd.f32 %v619, %v720
      %v722 = vpop.f32.mrf.mxu0
      %v723 = vadd.f32 %v623, %v722
      %724 = vmatprep.mubr.f32.mxu0 %v260
      %725 = vmatmul.mubr.f32.gmra.mxu0 %v259
      %v726 = vpop.f32.mrf.mxu0
      %v727 = vadd.f32 %v619, %v726
      %v728 = vpop.f32.mrf.mxu0
      %v729 = vadd.f32 %v623, %v728
      %730 = vmatprep.mubr.f32.mxu0 %v265
      %731 = vmatmul.mubr.f32.gmra.mxu0 %v264
      %v732 = vpop.f32.mrf.mxu0
      %v733 = vadd.f32 %v619, %v732
      %v734 = vpop.f32.mrf.mxu0
      %v735 = vadd.f32 %v623, %v734
      %736 = vmatprep.mubr.f32.mxu0 %v270
      %737 = vmatmul.mubr.f32.gmra.mxu0 %v269
      %v738 = vpop.f32.mrf.mxu0
      %v739 = vadd.f32 %v619, %v738
      %v740 = vpop.f32.mrf.mxu0
      %v741 = vadd.f32 %v623, %v740
      %742 = vdwg.mxu0
      %743 = vmatprep.subr.mxu0 %v510
      %744 = vmatpush1.msra.mxu0 %v509
      %745 = vmatprep.subr.mxu0 %v505
      %746 = vmatpush1.msra.mxu0 %v504
      %747 = vmatprep.subr.mxu0 %v500
      %748 = vmatpush1.msra.mxu0 %v499
      %749 = vmatprep.subr.mxu0 %v495
      %750 = vmatpush1.msra.mxu0 %v494
      %751 = vmatprep.subr.mxu0 %v490
      %752 = vmatpush1.msra.mxu0 %v489
      %753 = vmatprep.subr.mxu0 %v485
      %754 = vmatpush1.msra.mxu0 %v484
      %755 = vmatprep.subr.mxu0 %v480
      %756 = vmatpush1.msra.mxu0 %v479
      %757 = vmatprep.subr.mxu0 %v475
      %758 = vmatpush1.msra.mxu0 %v474
      %759 = vmatprep.subr.mxu0 %v470
      %760 = vmatpush1.msra.mxu0 %v469
      %761 = vmatprep.subr.mxu0 %v465
      %762 = vmatpush1.msra.mxu0 %v464
      %763 = vmatprep.subr.mxu0 %v460
      %764 = vmatpush1.msra.mxu0 %v459
      %765 = vmatprep.subr.mxu0 %v455
      %766 = vmatpush1.msra.mxu0 %v454
      %767 = vmatprep.subr.mxu0 %v450
      %768 = vmatpush1.msra.mxu0 %v449
      %769 = vmatprep.subr.mxu0 %v445
      %770 = vmatpush1.msra.mxu0 %v444
      %771 = vmatprep.subr.mxu0 %v440
      %772 = vmatpush1.msra.mxu0 %v439
      %773 = vmatprep.subr.mxu0 %v435
      %774 = vmatpush1.msra.mxu0 %v434
      %775 = vmatprep.subr.mxu0 %v590
      %776 = vmatpush2.msra.mxu0 %v589
      %777 = vmatprep.subr.mxu0 %v585
      %778 = vmatpush2.msra.mxu0 %v584
      %779 = vmatprep.subr.mxu0 %v580
      %780 = vmatpush2.msra.mxu0 %v579
      %781 = vmatprep.subr.mxu0 %v575
      %782 = vmatpush2.msra.mxu0 %v574
      %783 = vmatprep.subr.mxu0 %v570
      %784 = vmatpush2.msra.mxu0 %v569
      %785 = vmatprep.subr.mxu0 %v565
      %786 = vmatpush2.msra.mxu0 %v564
      %787 = vmatprep.subr.mxu0 %v560
      %788 = vmatpush2.msra.mxu0 %v559
      %789 = vmatprep.subr.mxu0 %v555
      %790 = vmatpush2.msra.mxu0 %v554
      %791 = vmatprep.subr.mxu0 %v550
      %792 = vmatpush2.msra.mxu0 %v549
      %793 = vmatprep.subr.mxu0 %v545
      %794 = vmatpush2.msra.mxu0 %v544
      %795 = vmatprep.subr.mxu0 %v540
      %796 = vmatpush2.msra.mxu0 %v539
      %797 = vmatprep.subr.mxu0 %v535
      %798 = vmatpush2.msra.mxu0 %v534
      %799 = vmatprep.subr.mxu0 %v530
      %800 = vmatpush2.msra.mxu0 %v529
      %801 = vmatprep.subr.mxu0 %v525
      %802 = vmatpush2.msra.mxu0 %v524
      %803 = vmatprep.subr.mxu0 %v520
      %804 = vmatpush2.msra.mxu0 %v519
      %805 = vmatprep.subr.mxu0 %v515
      %806 = vmatpush2.msra.mxu0 %v514
      %807 = vmatprep.mubr.f32.mxu0 %v257
      %808 = vmatmul.mubr.f32.gmra.mxu0 %v256
      %v809 = vpop.f32.mrf.mxu0
      %v810 = vadd.f32 %v721, %v809
      %v811 = vpop.f32.mrf.mxu0
      %v812 = vadd.f32 %v723, %v811
      %813 = vmatprep.mubr.f32.mxu0 %v262
      %814 = vmatmul.mubr.f32.gmra.mxu0 %v261
      %v815 = vpop.f32.mrf.mxu0
      %v816 = vadd.f32 %v727, %v815
      %v817 = vpop.f32.mrf.mxu0
      %v818 = vadd.f32 %v729, %v817
      %819 = vmatprep.mubr.f32.mxu0 %v267
      %820 = vmatmul.mubr.f32.gmra.mxu0 %v266
      %v821 = vpop.f32.mrf.mxu0
      %v822 = vadd.f32 %v733, %v821
      %v823 = vpop.f32.mrf.mxu0
      %v824 = vadd.f32 %v735, %v823
      %825 = vmatprep.mubr.f32.mxu0 %v272
      %826 = vmatmul.mubr.f32.gmra.mxu0 %v271
      %v827 = vpop.f32.mrf.mxu0
      %v828 = vadd.f32 %v739, %v827
      %v829 = vpop.f32.mrf.mxu0
      %v830 = vadd.f32 %v741, %v829
      %831 = vdwg.mxu0
      %832 = vmatprep.subr.mxu0 0.0
      %833 = vmatpush1.msra.mxu0 0.0
      %834 = vmatprep.subr.mxu0 0.0
      %835 = vmatpush1.msra.mxu0 0.0
      %836 = vmatprep.subr.mxu0 0.0
      %837 = vmatpush1.msra.mxu0 0.0
      %838 = vmatprep.subr.mxu0 0.0
      %839 = vmatpush1.msra.mxu0 0.0
      %840 = vmatprep.subr.mxu0 0.0
      %841 = vmatpush1.msra.mxu0 0.0
      %842 = vmatprep.subr.mxu0 0.0
      %843 = vmatpush1.msra.mxu0 0.0
      %844 = vmatprep.subr.mxu0 0.0
      %845 = vmatpush1.msra.mxu0 0.0
      %846 = vmatprep.subr.mxu0 0.0
      %847 = vmatpush1.msra.mxu0 0.0
      %848 = vmatprep.subr.mxu0 0.0
      %849 = vmatpush1.msra.mxu0 0.0
      %850 = vmatprep.subr.mxu0 0.0
      %851 = vmatpush1.msra.mxu0 0.0
      %852 = vmatprep.subr.mxu0 0.0
      %853 = vmatpush1.msra.mxu0 0.0
      %854 = vmatprep.subr.mxu0 0.0
      %855 = vmatpush1.msra.mxu0 0.0
      %856 = vmatprep.subr.mxu0 %v610
      %857 = vmatpush1.msra.mxu0 %v609
      %858 = vmatprep.subr.mxu0 %v605
      %859 = vmatpush1.msra.mxu0 %v604
      %860 = vmatprep.subr.mxu0 %v600
      %861 = vmatpush1.msra.mxu0 %v599
      %862 = vmatprep.subr.mxu0 %v595
      %863 = vmatpush1.msra.mxu0 %v594
      %864 = vmatprep.subr.mxu0 0.0
      %865 = vmatpush2.msra.mxu0 0.0
      %866 = vmatprep.subr.mxu0 0.0
      %867 = vmatpush2.msra.mxu0 0.0
      %868 = vmatprep.subr.mxu0 0.0
      %869 = vmatpush2.msra.mxu0 0.0
      %870 = vmatprep.subr.mxu0 0.0
      %871 = vmatpush2.msra.mxu0 0.0
      %872 = vmatprep.subr.mxu0 0.0
      %873 = vmatpush2.msra.mxu0 0.0
      %874 = vmatprep.subr.mxu0 0.0
      %875 = vmatpush2.msra.mxu0 0.0
      %876 = vmatprep.subr.mxu0 0.0
      %877 = vmatpush2.msra.mxu0 0.0
      %878 = vmatprep.subr.mxu0 0.0
      %879 = vmatpush2.msra.mxu0 0.0
      %880 = vmatprep.subr.mxu0 0.0
      %881 = vmatpush2.msra.mxu0 0.0
      %882 = vmatprep.subr.mxu0 0.0
      %883 = vmatpush2.msra.mxu0 0.0
      %884 = vmatprep.subr.mxu0 0.0
      %885 = vmatpush2.msra.mxu0 0.0
      %886 = vmatprep.subr.mxu0 0.0
      %887 = vmatpush2.msra.mxu0 0.0
      %888 = vmatprep.subr.mxu0 0.0
      %889 = vmatpush2.msra.mxu0 0.0
      %890 = vmatprep.subr.mxu0 0.0
      %891 = vmatpush2.msra.mxu0 0.0
      %892 = vmatprep.subr.mxu0 0.0
      %893 = vmatpush2.msra.mxu0 0.0
      %894 = vmatprep.subr.mxu0 0.0
      %895 = vmatpush2.msra.mxu0 0.0
      %896 = vmatprep.mubr.f32.mxu0 0.0
      %897 = vmatmul.mubr.f32.gmra.mxu0 %v643
      %v898 = vpop.f32.mrf.mxu0
      %v899 = vadd.f32 %v810, %v898
      %v900 = vpop.f32.mrf.mxu0
      %v901 = vadd.f32 %v812, %v900
      %902 = vmatprep.mubr.f32.mxu0 0.0
      %903 = vmatmul.mubr.f32.gmra.mxu0 %v646
      %v904 = vpop.f32.mrf.mxu0
      %v905 = vadd.f32 %v816, %v904
      %v906 = vpop.f32.mrf.mxu0
      %v907 = vadd.f32 %v818, %v906
      %908 = vmatprep.mubr.f32.mxu0 0.0
      %909 = vmatmul.mubr.f32.gmra.mxu0 %v649
      %v910 = vpop.f32.mrf.mxu0
      %v911 = vadd.f32 %v822, %v910
      %v912 = vpop.f32.mrf.mxu0
      %v913 = vadd.f32 %v824, %v912
      %914 = vmatprep.mubr.f32.mxu0 0.0
      %915 = vmatmul.mubr.f32.gmra.mxu0 %v652
      %v916 = vpop.f32.mrf.mxu0
      %v917 = vadd.f32 %v828, %v916
      %v918 = vpop.f32.mrf.mxu0
      %v919 = vadd.f32 %v830, %v918
      %920 = vdwg.mxu0
      %921 = vmatprep.subr.mxu0 %v352
      %922 = vmatpush1.msra.mxu0 %v351
      %923 = vmatprep.subr.mxu0 %v347
      %924 = vmatpush1.msra.mxu0 %v346
      %925 = vmatprep.subr.mxu0 %v342
      %926 = vmatpush1.msra.mxu0 %v341
      %927 = vmatprep.subr.mxu0 %v337
      %928 = vmatpush1.msra.mxu0 %v336
      %929 = vmatprep.subr.mxu0 %v332
      %930 = vmatpush1.msra.mxu0 %v331
      %931 = vmatprep.subr.mxu0 %v327
      %932 = vmatpush1.msra.mxu0 %v326
      %933 = vmatprep.subr.mxu0 %v322
      %934 = vmatpush1.msra.mxu0 %v321
      %935 = vmatprep.subr.mxu0 %v317
      %936 = vmatpush1.msra.mxu0 %v316
      %937 = vmatprep.subr.mxu0 %v312
      %938 = vmatpush1.msra.mxu0 %v311
      %939 = vmatprep.subr.mxu0 %v307
      %940 = vmatpush1.msra.mxu0 %v306
      %941 = vmatprep.subr.mxu0 %v302
      %942 = vmatpush1.msra.mxu0 %v301
      %943 = vmatprep.subr.mxu0 %v297
      %944 = vmatpush1.msra.mxu0 %v296
      %945 = vmatprep.subr.mxu0 %v292
      %946 = vmatpush1.msra.mxu0 %v291
      %947 = vmatprep.subr.mxu0 %v287
      %948 = vmatpush1.msra.mxu0 %v286
      %949 = vmatprep.subr.mxu0 %v282
      %950 = vmatpush1.msra.mxu0 %v281
      %951 = vmatprep.subr.mxu0 %v277
      %952 = vmatpush1.msra.mxu0 %v276
      %953 = vmatprep.subr.mxu0 %v432
      %954 = vmatpush2.msra.mxu0 %v431
      %955 = vmatprep.subr.mxu0 %v427
      %956 = vmatpush2.msra.mxu0 %v426
      %957 = vmatprep.subr.mxu0 %v422
      %958 = vmatpush2.msra.mxu0 %v421
      %959 = vmatprep.subr.mxu0 %v417
      %960 = vmatpush2.msra.mxu0 %v416
      %961 = vmatprep.subr.mxu0 %v412
      %962 = vmatpush2.msra.mxu0 %v411
      %963 = vmatprep.subr.mxu0 %v407
      %964 = vmatpush2.msra.mxu0 %v406
      %965 = vmatprep.subr.mxu0 %v402
      %966 = vmatpush2.msra.mxu0 %v401
      %967 = vmatprep.subr.mxu0 %v397
      %968 = vmatpush2.msra.mxu0 %v396
      %969 = vmatprep.subr.mxu0 %v392
      %970 = vmatpush2.msra.mxu0 %v391
      %971 = vmatprep.subr.mxu0 %v387
      %972 = vmatpush2.msra.mxu0 %v386
      %973 = vmatprep.subr.mxu0 %v382
      %974 = vmatpush2.msra.mxu0 %v381
      %975 = vmatprep.subr.mxu0 %v377
      %976 = vmatpush2.msra.mxu0 %v376
      %977 = vmatprep.subr.mxu0 %v372
      %978 = vmatpush2.msra.mxu0 %v371
      %979 = vmatprep.subr.mxu0 %v367
      %980 = vmatpush2.msra.mxu0 %v366
      %981 = vmatprep.subr.mxu0 %v362
      %982 = vmatpush2.msra.mxu0 %v361
      %983 = vmatprep.subr.mxu0 %v357
      %984 = vmatpush2.msra.mxu0 %v356
      %985 = vmatprep.mubr.f32.mxu0 %v255
      %986 = vmatmul.mubr.f32.gmra.mxu0 %v254
      %v987 = vpop.f32.mrf.mxu0
      %v988 = vadd.f32 %v627, %v987
      %v989 = vpop.f32.mrf.mxu0
      %v990 = vadd.f32 %v631, %v989
      %991 = vmatprep.mubr.f32.mxu0 %v260
      %992 = vmatmul.mubr.f32.gmra.mxu0 %v259
      %v993 = vpop.f32.mrf.mxu0
      %v994 = vadd.f32 %v627, %v993
      %v995 = vpop.f32.mrf.mxu0
      %v996 = vadd.f32 %v631, %v995
      %997 = vmatprep.mubr.f32.mxu0 %v265
      %998 = vmatmul.mubr.f32.gmra.mxu0 %v264
      %v999 = vpop.f32.mrf.mxu0
      %v1000 = vadd.f32 %v627, %v999
      %v1001 = vpop.f32.mrf.mxu0
      %v1002 = vadd.f32 %v631, %v1001
      %1003 = vmatprep.mubr.f32.mxu0 %v270
      %1004 = vmatmul.mubr.f32.gmra.mxu0 %v269
      %v1005 = vpop.f32.mrf.mxu0
      %v1006 = vadd.f32 %v627, %v1005
      %v1007 = vpop.f32.mrf.mxu0
      %v1008 = vadd.f32 %v631, %v1007
      %1009 = vdwg.mxu0
      %1010 = vmatprep.subr.mxu0 %v512
      %1011 = vmatpush1.msra.mxu0 %v511
      %1012 = vmatprep.subr.mxu0 %v507
      %1013 = vmatpush1.msra.mxu0 %v506
      %1014 = vmatprep.subr.mxu0 %v502
      %1015 = vmatpush1.msra.mxu0 %v501
      %1016 = vmatprep.subr.mxu0 %v497
      %1017 = vmatpush1.msra.mxu0 %v496
      %1018 = vmatprep.subr.mxu0 %v492
      %1019 = vmatpush1.msra.mxu0 %v491
      %1020 = vmatprep.subr.mxu0 %v487
      %1021 = vmatpush1.msra.mxu0 %v486
      %1022 = vmatprep.subr.mxu0 %v482
      %1023 = vmatpush1.msra.mxu0 %v481
      %1024 = vmatprep.subr.mxu0 %v477
      %1025 = vmatpush1.msra.mxu0 %v476
      %1026 = vmatprep.subr.mxu0 %v472
      %1027 = vmatpush1.msra.mxu0 %v471
      %1028 = vmatprep.subr.mxu0 %v467
      %1029 = vmatpush1.msra.mxu0 %v466
      %1030 = vmatprep.subr.mxu0 %v462
      %1031 = vmatpush1.msra.mxu0 %v461
      %1032 = vmatprep.subr.mxu0 %v457
      %1033 = vmatpush1.msra.mxu0 %v456
      %1034 = vmatprep.subr.mxu0 %v452
      %1035 = vmatpush1.msra.mxu0 %v451
      %1036 = vmatprep.subr.mxu0 %v447
      %1037 = vmatpush1.msra.mxu0 %v446
      %1038 = vmatprep.subr.mxu0 %v442
      %1039 = vmatpush1.msra.mxu0 %v441
      %1040 = vmatprep.subr.mxu0 %v437
      %1041 = vmatpush1.msra.mxu0 %v436
      %1042 = vmatprep.subr.mxu0 %v592
      %1043 = vmatpush2.msra.mxu0 %v591
      %1044 = vmatprep.subr.mxu0 %v587
      %1045 = vmatpush2.msra.mxu0 %v586
      %1046 = vmatprep.subr.mxu0 %v582
      %1047 = vmatpush2.msra.mxu0 %v581
      %1048 = vmatprep.subr.mxu0 %v577
      %1049 = vmatpush2.msra.mxu0 %v576
      %1050 = vmatprep.subr.mxu0 %v572
      %1051 = vmatpush2.msra.mxu0 %v571
      %1052 = vmatprep.subr.mxu0 %v567
      %1053 = vmatpush2.msra.mxu0 %v566
      %1054 = vmatprep.subr.mxu0 %v562
      %1055 = vmatpush2.msra.mxu0 %v561
      %1056 = vmatprep.subr.mxu0 %v557
      %1057 = vmatpush2.msra.mxu0 %v556
      %1058 = vmatprep.subr.mxu0 %v552
      %1059 = vmatpush2.msra.mxu0 %v551
      %1060 = vmatprep.subr.mxu0 %v547
      %1061 = vmatpush2.msra.mxu0 %v546
      %1062 = vmatprep.subr.mxu0 %v542
      %1063 = vmatpush2.msra.mxu0 %v541
      %1064 = vmatprep.subr.mxu0 %v537
      %1065 = vmatpush2.msra.mxu0 %v536
      %1066 = vmatprep.subr.mxu0 %v532
      %1067 = vmatpush2.msra.mxu0 %v531
      %1068 = vmatprep.subr.mxu0 %v527
      %1069 = vmatpush2.msra.mxu0 %v526
      %1070 = vmatprep.subr.mxu0 %v522
      %1071 = vmatpush2.msra.mxu0 %v521
      %1072 = vmatprep.subr.mxu0 %v517
      %1073 = vmatpush2.msra.mxu0 %v516
      %1074 = vmatprep.mubr.f32.mxu0 %v257
      %1075 = vmatmul.mubr.f32.gmra.mxu0 %v256
      %v1076 = vpop.f32.mrf.mxu0
      %v1077 = vadd.f32 %v988, %v1076
      %v1078 = vpop.f32.mrf.mxu0
      %v1079 = vadd.f32 %v990, %v1078
      %1080 = vmatprep.mubr.f32.mxu0 %v262
      %1081 = vmatmul.mubr.f32.gmra.mxu0 %v261
      %v1082 = vpop.f32.mrf.mxu0
      %v1083 = vadd.f32 %v994, %v1082
      %v1084 = vpop.f32.mrf.mxu0
      %v1085 = vadd.f32 %v996, %v1084
      %1086 = vmatprep.mubr.f32.mxu0 %v267
      %1087 = vmatmul.mubr.f32.gmra.mxu0 %v266
      %v1088 = vpop.f32.mrf.mxu0
      %v1089 = vadd.f32 %v1000, %v1088
      %v1090 = vpop.f32.mrf.mxu0
      %v1091 = vadd.f32 %v1002, %v1090
      %1092 = vmatprep.mubr.f32.mxu0 %v272
      %1093 = vmatmul.mubr.f32.gmra.mxu0 %v271
      %v1094 = vpop.f32.mrf.mxu0
      %v1095 = vadd.f32 %v1006, %v1094
      %v1096 = vpop.f32.mrf.mxu0
      %v1097 = vadd.f32 %v1008, %v1096
      %1098 = vdwg.mxu0
      %1099 = vmatprep.subr.mxu0 0.0
      %1100 = vmatpush1.msra.mxu0 0.0
      %1101 = vmatprep.subr.mxu0 0.0
      %1102 = vmatpush1.msra.mxu0 0.0
      %1103 = vmatprep.subr.mxu0 0.0
      %1104 = vmatpush1.msra.mxu0 0.0
      %1105 = vmatprep.subr.mxu0 0.0
      %1106 = vmatpush1.msra.mxu0 0.0
      %1107 = vmatprep.subr.mxu0 0.0
      %1108 = vmatpush1.msra.mxu0 0.0
      %1109 = vmatprep.subr.mxu0 0.0
      %1110 = vmatpush1.msra.mxu0 0.0
      %1111 = vmatprep.subr.mxu0 0.0
      %1112 = vmatpush1.msra.mxu0 0.0
      %1113 = vmatprep.subr.mxu0 0.0
      %1114 = vmatpush1.msra.mxu0 0.0
      %1115 = vmatprep.subr.mxu0 0.0
      %1116 = vmatpush1.msra.mxu0 0.0
      %1117 = vmatprep.subr.mxu0 0.0
      %1118 = vmatpush1.msra.mxu0 0.0
      %1119 = vmatprep.subr.mxu0 0.0
      %1120 = vmatpush1.msra.mxu0 0.0
      %1121 = vmatprep.subr.mxu0 0.0
      %1122 = vmatpush1.msra.mxu0 0.0
      %1123 = vmatprep.subr.mxu0 %v612
      %1124 = vmatpush1.msra.mxu0 %v611
      %1125 = vmatprep.subr.mxu0 %v607
      %1126 = vmatpush1.msra.mxu0 %v606
      %1127 = vmatprep.subr.mxu0 %v602
      %1128 = vmatpush1.msra.mxu0 %v601
      %1129 = vmatprep.subr.mxu0 %v597
      %1130 = vmatpush1.msra.mxu0 %v596
      %1131 = vmatprep.subr.mxu0 0.0
      %1132 = vmatpush2.msra.mxu0 0.0
      %1133 = vmatprep.subr.mxu0 0.0
      %1134 = vmatpush2.msra.mxu0 0.0
      %1135 = vmatprep.subr.mxu0 0.0
      %1136 = vmatpush2.msra.mxu0 0.0
      %1137 = vmatprep.subr.mxu0 0.0
      %1138 = vmatpush2.msra.mxu0 0.0
      %1139 = vmatprep.subr.mxu0 0.0
      %1140 = vmatpush2.msra.mxu0 0.0
      %1141 = vmatprep.subr.mxu0 0.0
      %1142 = vmatpush2.msra.mxu0 0.0
      %1143 = vmatprep.subr.mxu0 0.0
      %1144 = vmatpush2.msra.mxu0 0.0
      %1145 = vmatprep.subr.mxu0 0.0
      %1146 = vmatpush2.msra.mxu0 0.0
      %1147 = vmatprep.subr.mxu0 0.0
      %1148 = vmatpush2.msra.mxu0 0.0
      %1149 = vmatprep.subr.mxu0 0.0
      %1150 = vmatpush2.msra.mxu0 0.0
      %1151 = vmatprep.subr.mxu0 0.0
      %1152 = vmatpush2.msra.mxu0 0.0
      %1153 = vmatprep.subr.mxu0 0.0
      %1154 = vmatpush2.msra.mxu0 0.0
      %1155 = vmatprep.subr.mxu0 0.0
      %1156 = vmatpush2.msra.mxu0 0.0
      %1157 = vmatprep.subr.mxu0 0.0
      %1158 = vmatpush2.msra.mxu0 0.0
      %1159 = vmatprep.subr.mxu0 0.0
      %1160 = vmatpush2.msra.mxu0 0.0
      %1161 = vmatprep.subr.mxu0 0.0
      %1162 = vmatpush2.msra.mxu0 0.0
      %1163 = vmatprep.mubr.f32.mxu0 0.0
      %1164 = vmatmul.mubr.f32.gmra.mxu0 %v643
      %v1165 = vpop.f32.mrf.mxu0
      %v1166 = vadd.f32 %v1077, %v1165
      %v1167 = vpop.f32.mrf.mxu0
      %v1168 = vadd.f32 %v1079, %v1167
      %1169 = vmatprep.mubr.f32.mxu0 0.0
      %1170 = vmatmul.mubr.f32.gmra.mxu0 %v646
      %v1171 = vpop.f32.mrf.mxu0
      %v1172 = vadd.f32 %v1083, %v1171
      %v1173 = vpop.f32.mrf.mxu0
      %v1174 = vadd.f32 %v1085, %v1173
      %1175 = vmatprep.mubr.f32.mxu0 0.0
      %1176 = vmatmul.mubr.f32.gmra.mxu0 %v649
      %v1177 = vpop.f32.mrf.mxu0
      %v1178 = vadd.f32 %v1089, %v1177
      %v1179 = vpop.f32.mrf.mxu0
      %v1180 = vadd.f32 %v1091, %v1179
      %1181 = vmatprep.mubr.f32.mxu0 0.0
      %1182 = vmatmul.mubr.f32.gmra.mxu0 %v652
      %v1183 = vpop.f32.mrf.mxu0
      %v1184 = vadd.f32 %v1095, %v1183
      %v1185 = vpop.f32.mrf.mxu0
      %v1186 = vadd.f32 %v1097, %v1185
      %1187 = vdwg.mxu0
      %1188 = vmatprep.subr.mxu0 0.0
      %1189 = vmatpush1.msra.mxu0 %v353
      %1190 = vmatprep.subr.mxu0 0.0
      %1191 = vmatpush1.msra.mxu0 %v348
      %1192 = vmatprep.subr.mxu0 0.0
      %1193 = vmatpush1.msra.mxu0 %v343
      %1194 = vmatprep.subr.mxu0 0.0
      %1195 = vmatpush1.msra.mxu0 %v338
      %1196 = vmatprep.subr.mxu0 0.0
      %1197 = vmatpush1.msra.mxu0 %v333
      %1198 = vmatprep.subr.mxu0 0.0
      %1199 = vmatpush1.msra.mxu0 %v328
      %1200 = vmatprep.subr.mxu0 0.0
      %1201 = vmatpush1.msra.mxu0 %v323
      %1202 = vmatprep.subr.mxu0 0.0
      %1203 = vmatpush1.msra.mxu0 %v318
      %1204 = vmatprep.subr.mxu0 0.0
      %1205 = vmatpush1.msra.mxu0 %v313
      %1206 = vmatprep.subr.mxu0 0.0
      %1207 = vmatpush1.msra.mxu0 %v308
      %1208 = vmatprep.subr.mxu0 0.0
      %1209 = vmatpush1.msra.mxu0 %v303
      %1210 = vmatprep.subr.mxu0 0.0
      %1211 = vmatpush1.msra.mxu0 %v298
      %1212 = vmatprep.subr.mxu0 0.0
      %1213 = vmatpush1.msra.mxu0 %v293
      %1214 = vmatprep.subr.mxu0 0.0
      %1215 = vmatpush1.msra.mxu0 %v288
      %1216 = vmatprep.subr.mxu0 0.0
      %1217 = vmatpush1.msra.mxu0 %v283
      %1218 = vmatprep.subr.mxu0 0.0
      %1219 = vmatpush1.msra.mxu0 %v278
      %1220 = vmatprep.subr.mxu0 0.0
      %1221 = vmatpush2.msra.mxu0 %v433
      %1222 = vmatprep.subr.mxu0 0.0
      %1223 = vmatpush2.msra.mxu0 %v428
      %1224 = vmatprep.subr.mxu0 0.0
      %1225 = vmatpush2.msra.mxu0 %v423
      %1226 = vmatprep.subr.mxu0 0.0
      %1227 = vmatpush2.msra.mxu0 %v418
      %1228 = vmatprep.subr.mxu0 0.0
      %1229 = vmatpush2.msra.mxu0 %v413
      %1230 = vmatprep.subr.mxu0 0.0
      %1231 = vmatpush2.msra.mxu0 %v408
      %1232 = vmatprep.subr.mxu0 0.0
      %1233 = vmatpush2.msra.mxu0 %v403
      %1234 = vmatprep.subr.mxu0 0.0
      %1235 = vmatpush2.msra.mxu0 %v398
      %1236 = vmatprep.subr.mxu0 0.0
      %1237 = vmatpush2.msra.mxu0 %v393
      %1238 = vmatprep.subr.mxu0 0.0
      %1239 = vmatpush2.msra.mxu0 %v388
      %1240 = vmatprep.subr.mxu0 0.0
      %1241 = vmatpush2.msra.mxu0 %v383
      %1242 = vmatprep.subr.mxu0 0.0
      %1243 = vmatpush2.msra.mxu0 %v378
      %1244 = vmatprep.subr.mxu0 0.0
      %1245 = vmatpush2.msra.mxu0 %v373
      %1246 = vmatprep.subr.mxu0 0.0
      %1247 = vmatpush2.msra.mxu0 %v368
      %1248 = vmatprep.subr.mxu0 0.0
      %1249 = vmatpush2.msra.mxu0 %v363
      %1250 = vmatprep.subr.mxu0 0.0
      %1251 = vmatpush2.msra.mxu0 %v358
      %1252 = vmatprep.mubr.f32.mxu0 %v255
      %1253 = vmatmul.mubr.f32.gmra.mxu0 %v254
      %v1254 = vpop.f32.mrf.mxu0
      %v1255 = vadd.f32 %v635, %v1254
      %v1256 = vpop.f32.mrf.mxu0
      %1257 = vmatprep.mubr.f32.mxu0 %v260
      %1258 = vmatmul.mubr.f32.gmra.mxu0 %v259
      %v1259 = vpop.f32.mrf.mxu0
      %v1260 = vadd.f32 %v635, %v1259
      %v1261 = vpop.f32.mrf.mxu0
      %1262 = vmatprep.mubr.f32.mxu0 %v265
      %1263 = vmatmul.mubr.f32.gmra.mxu0 %v264
      %v1264 = vpop.f32.mrf.mxu0
      %v1265 = vadd.f32 %v635, %v1264
      %v1266 = vpop.f32.mrf.mxu0
      %1267 = vmatprep.mubr.f32.mxu0 %v270
      %1268 = vmatmul.mubr.f32.gmra.mxu0 %v269
      %v1269 = vpop.f32.mrf.mxu0
      %v1270 = vadd.f32 %v635, %v1269
      %v1271 = vpop.f32.mrf.mxu0
      %1272 = vdwg.mxu0
      %1273 = vmatprep.subr.mxu0 0.0
      %1274 = vmatpush1.msra.mxu0 %v513
      %1275 = vmatprep.subr.mxu0 0.0
      %1276 = vmatpush1.msra.mxu0 %v508
      %1277 = vmatprep.subr.mxu0 0.0
      %1278 = vmatpush1.msra.mxu0 %v503
      %1279 = vmatprep.subr.mxu0 0.0
      %1280 = vmatpush1.msra.mxu0 %v498
      %1281 = vmatprep.subr.mxu0 0.0
      %1282 = vmatpush1.msra.mxu0 %v493
      %1283 = vmatprep.subr.mxu0 0.0
      %1284 = vmatpush1.msra.mxu0 %v488
      %1285 = vmatprep.subr.mxu0 0.0
      %1286 = vmatpush1.msra.mxu0 %v483
      %1287 = vmatprep.subr.mxu0 0.0
      %1288 = vmatpush1.msra.mxu0 %v478
      %1289 = vmatprep.subr.mxu0 0.0
      %1290 = vmatpush1.msra.mxu0 %v473
      %1291 = vmatprep.subr.mxu0 0.0
      %1292 = vmatpush1.msra.mxu0 %v468
      %1293 = vmatprep.subr.mxu0 0.0
      %1294 = vmatpush1.msra.mxu0 %v463
      %1295 = vmatprep.subr.mxu0 0.0
      %1296 = vmatpush1.msra.mxu0 %v458
      %1297 = vmatprep.subr.mxu0 0.0
      %1298 = vmatpush1.msra.mxu0 %v453
      %1299 = vmatprep.subr.mxu0 0.0
      %1300 = vmatpush1.msra.mxu0 %v448
      %1301 = vmatprep.subr.mxu0 0.0
      %1302 = vmatpush1.msra.mxu0 %v443
      %1303 = vmatprep.subr.mxu0 0.0
      %1304 = vmatpush1.msra.mxu0 %v438
      %1305 = vmatprep.subr.mxu0 0.0
      %1306 = vmatpush2.msra.mxu0 %v593
      %1307 = vmatprep.subr.mxu0 0.0
      %1308 = vmatpush2.msra.mxu0 %v588
      %1309 = vmatprep.subr.mxu0 0.0
      %1310 = vmatpush2.msra.mxu0 %v583
      %1311 = vmatprep.subr.mxu0 0.0
      %1312 = vmatpush2.msra.mxu0 %v578
      %1313 = vmatprep.subr.mxu0 0.0
      %1314 = vmatpush2.msra.mxu0 %v573
      %1315 = vmatprep.subr.mxu0 0.0
      %1316 = vmatpush2.msra.mxu0 %v568
      %1317 = vmatprep.subr.mxu0 0.0
      %1318 = vmatpush2.msra.mxu0 %v563
      %1319 = vmatprep.subr.mxu0 0.0
      %1320 = vmatpush2.msra.mxu0 %v558
      %1321 = vmatprep.subr.mxu0 0.0
      %1322 = vmatpush2.msra.mxu0 %v553
      %1323 = vmatprep.subr.mxu0 0.0
      %1324 = vmatpush2.msra.mxu0 %v548
      %1325 = vmatprep.subr.mxu0 0.0
      %1326 = vmatpush2.msra.mxu0 %v543
      %1327 = vmatprep.subr.mxu0 0.0
      %1328 = vmatpush2.msra.mxu0 %v538
      %1329 = vmatprep.subr.mxu0 0.0
      %1330 = vmatpush2.msra.mxu0 %v533
      %1331 = vmatprep.subr.mxu0 0.0
      %1332 = vmatpush2.msra.mxu0 %v528
      %1333 = vmatprep.subr.mxu0 0.0
      %1334 = vmatpush2.msra.mxu0 %v523
      %1335 = vmatprep.subr.mxu0 0.0
      %1336 = vmatpush2.msra.mxu0 %v518
      %1337 = vmatprep.mubr.f32.mxu0 %v257
      %1338 = vmatmul.mubr.f32.gmra.mxu0 %v256
      %v1339 = vpop.f32.mrf.mxu0
      %v1340 = vadd.f32 %v1255, %v1339
      %v1341 = vpop.f32.mrf.mxu0
      %1342 = vmatprep.mubr.f32.mxu0 %v262
      %1343 = vmatmul.mubr.f32.gmra.mxu0 %v261
      %v1344 = vpop.f32.mrf.mxu0
      %v1345 = vadd.f32 %v1260, %v1344
      %v1346 = vpop.f32.mrf.mxu0
      %1347 = vmatprep.mubr.f32.mxu0 %v267
      %1348 = vmatmul.mubr.f32.gmra.mxu0 %v266
      %v1349 = vpop.f32.mrf.mxu0
      %v1350 = vadd.f32 %v1265, %v1349
      %v1351 = vpop.f32.mrf.mxu0
      %1352 = vmatprep.mubr.f32.mxu0 %v272
      %1353 = vmatmul.mubr.f32.gmra.mxu0 %v271
      %v1354 = vpop.f32.mrf.mxu0
      %v1355 = vadd.f32 %v1270, %v1354
      %v1356 = vpop.f32.mrf.mxu0
      %1357 = vdwg.mxu0
      %1358 = vmatprep.subr.mxu0 0.0
      %1359 = vmatpush1.msra.mxu0 0.0
      %1360 = vmatprep.subr.mxu0 0.0
      %1361 = vmatpush1.msra.mxu0 0.0
      %1362 = vmatprep.subr.mxu0 0.0
      %1363 = vmatpush1.msra.mxu0 0.0
      %1364 = vmatprep.subr.mxu0 0.0
      %1365 = vmatpush1.msra.mxu0 0.0
      %1366 = vmatprep.subr.mxu0 0.0
      %1367 = vmatpush1.msra.mxu0 0.0
      %1368 = vmatprep.subr.mxu0 0.0
      %1369 = vmatpush1.msra.mxu0 0.0
      %1370 = vmatprep.subr.mxu0 0.0
      %1371 = vmatpush1.msra.mxu0 0.0
      %1372 = vmatprep.subr.mxu0 0.0
      %1373 = vmatpush1.msra.mxu0 0.0
      %1374 = vmatprep.subr.mxu0 0.0
      %1375 = vmatpush1.msra.mxu0 0.0
      %1376 = vmatprep.subr.mxu0 0.0
      %1377 = vmatpush1.msra.mxu0 0.0
      %1378 = vmatprep.subr.mxu0 0.0
      %1379 = vmatpush1.msra.mxu0 0.0
      %1380 = vmatprep.subr.mxu0 0.0
      %1381 = vmatpush1.msra.mxu0 0.0
      %1382 = vmatprep.subr.mxu0 0.0
      %1383 = vmatpush1.msra.mxu0 %v613
      %1384 = vmatprep.subr.mxu0 0.0
      %1385 = vmatpush1.msra.mxu0 %v608
      %1386 = vmatprep.subr.mxu0 0.0
      %1387 = vmatpush1.msra.mxu0 %v603
      %1388 = vmatprep.subr.mxu0 0.0
      %1389 = vmatpush1.msra.mxu0 %v598
      %1390 = vmatprep.subr.mxu0 0.0
      %1391 = vmatpush2.msra.mxu0 0.0
      %1392 = vmatprep.subr.mxu0 0.0
      %1393 = vmatpush2.msra.mxu0 0.0
      %1394 = vmatprep.subr.mxu0 0.0
      %1395 = vmatpush2.msra.mxu0 0.0
      %1396 = vmatprep.subr.mxu0 0.0
      %1397 = vmatpush2.msra.mxu0 0.0
      %1398 = vmatprep.subr.mxu0 0.0
      %1399 = vmatpush2.msra.mxu0 0.0
      %1400 = vmatprep.subr.mxu0 0.0
      %1401 = vmatpush2.msra.mxu0 0.0
      %1402 = vmatprep.subr.mxu0 0.0
      %1403 = vmatpush2.msra.mxu0 0.0
      %1404 = vmatprep.subr.mxu0 0.0
      %1405 = vmatpush2.msra.mxu0 0.0
      %1406 = vmatprep.subr.mxu0 0.0
      %1407 = vmatpush2.msra.mxu0 0.0
      %1408 = vmatprep.subr.mxu0 0.0
      %1409 = vmatpush2.msra.mxu0 0.0
      %1410 = vmatprep.subr.mxu0 0.0
      %1411 = vmatpush2.msra.mxu0 0.0
      %1412 = vmatprep.subr.mxu0 0.0
      %1413 = vmatpush2.msra.mxu0 0.0
      %1414 = vmatprep.subr.mxu0 0.0
      %1415 = vmatpush2.msra.mxu0 0.0
      %1416 = vmatprep.subr.mxu0 0.0
      %1417 = vmatpush2.msra.mxu0 0.0
      %1418 = vmatprep.subr.mxu0 0.0
      %1419 = vmatpush2.msra.mxu0 0.0
      %1420 = vmatprep.subr.mxu0 0.0
      %1421 = vmatpush2.msra.mxu0 0.0
      %1422 = vmatprep.mubr.f32.mxu0 0.0
      %1423 = vmatmul.mubr.f32.gmra.mxu0 %v643
      %v1424 = vpop.f32.mrf.mxu0
      %v1425 = vadd.f32 %v1340, %v1424
      %v1426 = vpop.f32.mrf.mxu0
      %1427 = vmatprep.mubr.f32.mxu0 0.0
      %1428 = vmatmul.mubr.f32.gmra.mxu0 %v646
      %v1429 = vpop.f32.mrf.mxu0
      %v1430 = vadd.f32 %v1345, %v1429
      %v1431 = vpop.f32.mrf.mxu0
      %1432 = vmatprep.mubr.f32.mxu0 0.0
      %1433 = vmatmul.mubr.f32.gmra.mxu0 %v649
      %v1434 = vpop.f32.mrf.mxu0
      %v1435 = vadd.f32 %v1350, %v1434
      %v1436 = vpop.f32.mrf.mxu0
      %1437 = vmatprep.mubr.f32.mxu0 0.0
      %1438 = vmatmul.mubr.f32.gmra.mxu0 %v652
      %v1439 = vpop.f32.mrf.mxu0
      %v1440 = vadd.f32 %v1355, %v1439
      %v1441 = vpop.f32.mrf.mxu0
      %1442 = vdwg.mxu0
      %1443 = vst [vmem:[%s244] sm:$0xff] %v899
      %1444 = vst [vmem:[%s244 + $0x8] sm:$0xff] %v901
      %1445 = vst [vmem:[%s244 + $0x10] sm:$0xff] %v1166
      %1446 = vst [vmem:[%s244 + $0x18] sm:$0xff] %v1168
      %1447 = vst.msk [vmem:[%s244 + $0x20] sm:$0xff] %vm641, %v1425
      %1448 = vst [vmem:[%s244 + $0x28] sm:$0xff] %v905
      %1449 = vst [vmem:[%s244 + $0x30] sm:$0xff] %v907
      %1450 = vst [vmem:[%s244 + $0x38] sm:$0xff] %v1172
      %1451 = vst [vmem:[%s244 + $0x40] sm:$0xff] %v1174
      %1452 = vst.msk [vmem:[%s244 + $0x48] sm:$0xff] %vm641, %v1430
      %1453 = vst [vmem:[%s244 + $0x50] sm:$0xff] %v911
      %1454 = vst [vmem:[%s244 + $0x58] sm:$0xff] %v913
      %1455 = vst [vmem:[%s244 + $0x60] sm:$0xff] %v1178
      %1456 = vst [vmem:[%s244 + $0x68] sm:$0xff] %v1180
      %1457 = vst.msk [vmem:[%s244 + $0x70] sm:$0xff] %vm641, %v1435
      %1458 = vst [vmem:[%s244 + $0x78] sm:$0xff] %v917
      %1459 = vst [vmem:[%s244 + $0x80] sm:$0xff] %v919
      %1460 = vst [vmem:[%s244 + $0x88] sm:$0xff] %v1184
      %1461 = vst [vmem:[%s244 + $0x90] sm:$0xff] %v1186
      %1462 = vst.msk [vmem:[%s244 + $0x98] sm:$0xff] %vm641, %v1440
      %v1463 = vadd.f32 %v899, %v905
      %v1464 = vadd.f32 %v1463, %v911
      %v1465 = vadd.f32 %v1464, %v917
      %v1466 = vrot.slane %v1465, 4
      %v1467 = vadd.f32 %v1465, %v1466
      %v1468 = vrot.slane %v1467, 2
      %v1469 = vadd.f32 %v1467, %v1468
      %v1470 = vrot.slane %v1469, 1
      %v1471 = vadd.f32 %v1469, %v1470
      %v1472 = vadd.f32 %v901, %v907
      %v1473 = vadd.f32 %v1472, %v913
      %v1474 = vadd.f32 %v1473, %v919
      %v1475 = vrot.slane %v1474, 4
      %v1476 = vadd.f32 %v1474, %v1475
      %v1477 = vrot.slane %v1476, 2
      %v1478 = vadd.f32 %v1476, %v1477
      %v1479 = vrot.slane %v1478, 1
      %v1480 = vadd.f32 %v1478, %v1479
      %v1481 = vadd.f32 %v1166, %v1172
      %v1482 = vadd.f32 %v1481, %v1178
      %v1483 = vadd.f32 %v1482, %v1184
      %v1484 = vrot.slane %v1483, 4
      %v1485 = vadd.f32 %v1483, %v1484
      %v1486 = vrot.slane %v1485, 2
      %v1487 = vadd.f32 %v1485, %v1486
      %v1488 = vrot.slane %v1487, 1
      %v1489 = vadd.f32 %v1487, %v1488
      %v1490 = vadd.f32 %v1168, %v1174
      %v1491 = vadd.f32 %v1490, %v1180
      %v1492 = vadd.f32 %v1491, %v1186
      %v1493 = vrot.slane %v1492, 4
      %v1494 = vadd.f32 %v1492, %v1493
      %v1495 = vrot.slane %v1494, 2
      %v1496 = vadd.f32 %v1494, %v1495
      %v1497 = vrot.slane %v1496, 1
      %v1498 = vadd.f32 %v1496, %v1497
      %v1499 = vsel %vm641, %v1425, 0.0
      %v1500 = vsel %vm641, %v1430, 0.0
      %v1501 = vadd.f32 %v1499, %v1500
      %v1502 = vsel %vm641, %v1435, 0.0
      %v1503 = vadd.f32 %v1501, %v1502
      %v1504 = vsel %vm641, %v1440, 0.0
      %v1505 = vadd.f32 %v1503, %v1504
      %v1506 = vrot.slane %v1505, 4
      %v1507 = vadd.f32 %v1505, %v1506
      %v1508 = vrot.slane %v1507, 2
      %v1509 = vadd.f32 %v1507, %v1508
      %v1510 = vrot.slane %v1509, 1
      %v1511 = vadd.f32 %v1509, %v1510
      %v1517 = vcombine.low %v1471, %v1480
      %v1518 = vcombine.low %v1489, %v1498
      %v1520 = vunpack.c.l.s4 1966171168
      %v1521 = vunpack.c.0.s8 %v1520
      %v1522 = vlaneseq
      %v1523 = vshrl.u32 %v1522, 7
      %v1524 = vsub.s32 %v1521, %v1523
      %v1525 = vrot.slane %v1517, %v1524
      %v1527 = vunpack.c.l.s4 1966171168
      %v1528 = vunpack.c.0.s8 %v1527
      %v1529 = vlaneseq
      %v1530 = vshrl.u32 %v1529, 7
      %v1531 = vsub.s32 %v1528, %v1530
      %v1532 = vrot.slane %v1518, %v1531
      %v1534 = vunpack.c.l.s4 1966171168
      %v1535 = vunpack.c.0.s8 %v1534
      %v1536 = vlaneseq
      %v1537 = vshrl.u32 %v1536, 7
      %v1538 = vsub.s32 %v1535, %v1537
      %v1539 = vrot.slane %v1511, %v1538
      %v1540 = vcombine.low %v1525, %v1532
      %v1542 = vunpack.c.l.s4 1966171168
      %v1543 = vunpack.c.0.s8 %v1542
      %v1544 = vlaneseq
      %v1545 = vshrl.u32 %v1544, 7
      %v1546 = vsub.s32 %v1543, %v1545
      %v1547 = vrot.slane %v1540, %v1546
      %v1549 = vunpack.c.l.s4 1966171168
      %v1550 = vunpack.c.0.s8 %v1549
      %v1551 = vlaneseq
      %v1552 = vshrl.u32 %v1551, 7
      %v1553 = vsub.s32 %v1550, %v1552
      %v1554 = vrot.slane %v1539, %v1553
      %v1555 = vcombine.low %v1547, %v1554
      %v1557 = vlaneseq
      %vm1558 = vcmp.ge.s32.totalorder %v1557, 0
      %vm1559 = vcmp.lt.s32.totalorder %v1557, 544
      %vm1560 = vmand %vm1558, %vm1559
      %1561 = vst.msk [vmem:[%s249] sm:$0x1f] %vm1560, %v1555
      %v1562 = vmul.f32 %v899, %v899
      %v1563 = vmul.f32 %v901, %v901
      %v1564 = vmul.f32 %v1166, %v1166
      %v1565 = vmul.f32 %v1168, %v1168
      %v1566 = vmul.f32 %v1425, %v1425
      %v1567 = vmul.f32 %v905, %v905
      %v1568 = vmul.f32 %v907, %v907
      %v1569 = vmul.f32 %v1172, %v1172
      %v1570 = vmul.f32 %v1174, %v1174
      %v1571 = vmul.f32 %v1430, %v1430
      %v1572 = vmul.f32 %v911, %v911
      %v1573 = vmul.f32 %v913, %v913
      %v1574 = vmul.f32 %v1178, %v1178
      %v1575 = vmul.f32 %v1180, %v1180
      %v1576 = vmul.f32 %v1435, %v1435
      %v1577 = vmul.f32 %v917, %v917
      %v1578 = vmul.f32 %v919, %v919
      %v1579 = vmul.f32 %v1184, %v1184
      %v1580 = vmul.f32 %v1186, %v1186
      %v1581 = vmul.f32 %v1440, %v1440
      %v1582 = vadd.f32 %v1562, %v1567
      %v1583 = vadd.f32 %v1582, %v1572
      %v1584 = vadd.f32 %v1583, %v1577
      %v1585 = vrot.slane %v1584, 4
      %v1586 = vadd.f32 %v1584, %v1585
      %v1587 = vrot.slane %v1586, 2
      %v1588 = vadd.f32 %v1586, %v1587
      %v1589 = vrot.slane %v1588, 1
      %v1590 = vadd.f32 %v1588, %v1589
      %v1591 = vadd.f32 %v1563, %v1568
      %v1592 = vadd.f32 %v1591, %v1573
      %v1593 = vadd.f32 %v1592, %v1578
      %v1594 = vrot.slane %v1593, 4
      %v1595 = vadd.f32 %v1593, %v1594
      %v1596 = vrot.slane %v1595, 2
      %v1597 = vadd.f32 %v1595, %v1596
      %v1598 = vrot.slane %v1597, 1
      %v1599 = vadd.f32 %v1597, %v1598
      %v1600 = vadd.f32 %v1564, %v1569
      %v1601 = vadd.f32 %v1600, %v1574
      %v1602 = vadd.f32 %v1601, %v1579
      %v1603 = vrot.slane %v1602, 4
      %v1604 = vadd.f32 %v1602, %v1603
      %v1605 = vrot.slane %v1604, 2
      %v1606 = vadd.f32 %v1604, %v1605
      %v1607 = vrot.slane %v1606, 1
      %v1608 = vadd.f32 %v1606, %v1607
      %v1609 = vadd.f32 %v1565, %v1570
      %v1610 = vadd.f32 %v1609, %v1575
      %v1611 = vadd.f32 %v1610, %v1580
      %v1612 = vrot.slane %v1611, 4
      %v1613 = vadd.f32 %v1611, %v1612
      %v1614 = vrot.slane %v1613, 2
      %v1615 = vadd.f32 %v1613, %v1614
      %v1616 = vrot.slane %v1615, 1
      %v1617 = vadd.f32 %v1615, %v1616
      %v1618 = vsel %vm641, %v1566, 0.0
      %v1619 = vsel %vm641, %v1571, 0.0
      %v1620 = vadd.f32 %v1618, %v1619
      %v1621 = vsel %vm641, %v1576, 0.0
      %v1622 = vadd.f32 %v1620, %v1621
      %v1623 = vsel %vm641, %v1581, 0.0
      %v1624 = vadd.f32 %v1622, %v1623
      %v1625 = vrot.slane %v1624, 4
      %v1626 = vadd.f32 %v1624, %v1625
      %v1627 = vrot.slane %v1626, 2
      %v1628 = vadd.f32 %v1626, %v1627
      %v1629 = vrot.slane %v1628, 1
      %v1630 = vadd.f32 %v1628, %v1629
      %v1636 = vcombine.low %v1590, %v1599
      %v1637 = vcombine.low %v1608, %v1617
      %v1639 = vunpack.c.l.s4 1966171168
      %v1640 = vunpack.c.0.s8 %v1639
      %v1641 = vlaneseq
      %v1642 = vshrl.u32 %v1641, 7
      %v1643 = vsub.s32 %v1640, %v1642
      %v1644 = vrot.slane %v1636, %v1643
      %v1646 = vunpack.c.l.s4 1966171168
      %v1647 = vunpack.c.0.s8 %v1646
      %v1648 = vlaneseq
      %v1649 = vshrl.u32 %v1648, 7
      %v1650 = vsub.s32 %v1647, %v1649
      %v1651 = vrot.slane %v1637, %v1650
      %v1653 = vunpack.c.l.s4 1966171168
      %v1654 = vunpack.c.0.s8 %v1653
      %v1655 = vlaneseq
      %v1656 = vshrl.u32 %v1655, 7
      %v1657 = vsub.s32 %v1654, %v1656
      %v1658 = vrot.slane %v1630, %v1657
      %v1659 = vcombine.low %v1644, %v1651
      %v1661 = vunpack.c.l.s4 1966171168
      %v1662 = vunpack.c.0.s8 %v1661
      %v1663 = vlaneseq
      %v1664 = vshrl.u32 %v1663, 7
      %v1665 = vsub.s32 %v1662, %v1664
      %v1666 = vrot.slane %v1659, %v1665
      %v1668 = vunpack.c.l.s4 1966171168
      %v1669 = vunpack.c.0.s8 %v1668
      %v1670 = vlaneseq
      %v1671 = vshrl.u32 %v1670, 7
      %v1672 = vsub.s32 %v1669, %v1671
      %v1673 = vrot.slane %v1658, %v1672
      %v1674 = vcombine.low %v1666, %v1673
      %1676 = vst.msk [vmem:[%s253] sm:$0x1f] %vm1560, %v1674
      %s1677 = smul.u32 4, %s17
      %p1678 = scmp.lt.s32.totalorder %s1677, 15
      %s1679 = scalar_select %p1678, %s1677, 15
      %s1680 = smul.addr %s1679, 5
      %s1681 = smul.addr %s1680, 8
      %s1682 = scalar_lea.vmem %s3, %s1681
      %p1683 = scmp.lt.s32.totalorder %s17, 3
      %s1684 = scalar_select %p1683, %s17, 3
      %s1685 = smul.addr %s1684, 5
      %s1686 = scalar_lea.vmem %s4, %s1685
      %p1687 = scmp.lt.s32.totalorder %s17, 3
      %s1688 = scalar_select %p1687, %s17, 3
      %s1689 = smul.addr %s1688, 5
      %s1690 = scalar_lea.vmem %s5, %s1689
      // Predicated region
      $region33: #{_lambda_.2} parent=31 // pred_check
        %p1691 = pneg %p103
      $region34: #{_lambda_.2} parent=31 // pred_check_branch
        %1693 = sbr.rel (%p1691) target = $region36
      $region35: #{_lambda_.2} parent=31 // pred_region
        %s1694 = smul.u32 4, %s17
      $region36: #{_lambda_.2} parent=31 // pred_fallthru
        _
      // Predicated region
      $region37: #{_lambda_.2} parent=31 // pred_check
        %p1695 = pneg %p129
      $region38: #{_lambda_.2} parent=31 // pred_check_branch
        %1697 = sbr.rel (%p1695) target = $region40
      $region39: #{_lambda_.2} parent=31 // pred_region
        _
      $region40: #{_lambda_.2} parent=31 // pred_fallthru
        _
      // Predicated region
      $region41: #{_lambda_.2} parent=31 // pred_check
        %p1698 = pneg %p155
      $region42: #{_lambda_.2} parent=31 // pred_check_branch
        %1700 = sbr.rel (%p1698) target = $region44
      $region43: #{_lambda_.2} parent=31 // pred_region
        _
      $region44: #{_lambda_.2} parent=31 // pred_fallthru
        _
    $region32: #{_lambda_.2} parent=5 // pred_fallthru
      _
    %p1701 = scmp.le.s32.totalorder 2, %s12
    // Predicated region
    $region45: #{_lambda_.2} parent=5 // pred_check
      %p1702 = pneg %p1701
    $region46: #{_lambda_.2} parent=5 // pred_check_branch
      %1704 = sbr.rel (%p1702) target = $region48
    $region47: #{_lambda_.2} parent=5 // pred_region
      %s1705 = ssub.s32 %s12, 2
      // Predicated region
      $region49: #{_lambda_.2} parent=47 // pred_check
        %p1706 = pneg %p109
      $region50: #{_lambda_.2} parent=47 // pred_check_branch
        %1708 = sbr.rel (%p1706) target = $region52
      $region51: #{_lambda_.2} parent=47 // pred_region
        %s1709 = smul.u32 4, %s18
        %p1710 = scmp.lt.s32.totalorder %s1709, 15
        %s1711 = scalar_select %p1710, %s1709, 15
        %s1712 = smul.addr %s1711, 5
        %s1713 = smul.addr %s1712, 8
        %s1714 = scalar_lea.vmem %s3, %s1713
      $region52: #{_lambda_.2} parent=47 // pred_fallthru
        _
      // Predicated region
      $region53: #{_lambda_.2} parent=47 // pred_check
        %p1715 = pneg %p135
      $region54: #{_lambda_.2} parent=47 // pred_check_branch
        %1717 = sbr.rel (%p1715) target = $region56
      $region55: #{_lambda_.2} parent=47 // pred_region
        %p1718 = scmp.lt.s32.totalorder %s18, 3
        %s1719 = scalar_select %p1718, %s18, 3
        %s1720 = smul.addr %s1719, 5
        %s1721 = scalar_lea.vmem %s4, %s1720
      $region56: #{_lambda_.2} parent=47 // pred_fallthru
        _
      // Predicated region
      $region57: #{_lambda_.2} parent=47 // pred_check
        %p1722 = pneg %p161
      $region58: #{_lambda_.2} parent=47 // pred_check_branch
        %1724 = sbr.rel (%p1722) target = $region60
      $region59: #{_lambda_.2} parent=47 // pred_region
        %p1725 = scmp.lt.s32.totalorder %s18, 3
        %s1726 = scalar_select %p1725, %s18, 3
        %s1727 = smul.addr %s1726, 5
        %s1728 = scalar_lea.vmem %s5, %s1727
      $region60: #{_lambda_.2} parent=47 // pred_fallthru
        _
    $region48: #{_lambda_.2} parent=5 // pred_fallthru
      _
  $region6: #{_lambda_.2} parent=0 // loop_footer
    %s16 = sadd.s32 1, %s12
  $region7: #{_lambda_.2} parent=0 // loop_footer_branch
    %11 = sbr.rel target = $region3
  $region8: #{_lambda_.2} parent=0 // loop_exit
    _

</llo_original>
